<compile_context>
chip_gen: v7x
topology: tpu7x:2x2x1
jax: 0.10.0
libtpu: 0.0.40
codegen_flags: <defaults>
</compile_context>

<pallas_src>
import jax
import jax.numpy as jnp
from jax.experimental import pallas as pl
from jax.experimental.pallas import tpu as pltpu


# ---------------------------------------------------------------------------
# Single fused Pallas kernel: 4x GraphConv + classifier head
# ---------------------------------------------------------------------------
def net_kernel(
    a_ref, x_ref,
    w1a_ref, w1x_ref, b1_ref,
    w2a_ref, w2x_ref, b2_ref,
    w3a_ref, w3x_ref, b3_ref,
    w4a_ref, w4x_ref, b4_ref,
    fc1w_ref, fc1b_ref, alpha_ref,
    fc2w_ref, fc2b_ref,
    o_ref,
):
    A = a_ref[...]

    def gconv(x, wa_ref, wx_ref, b_ref):
        # MeanAggregator: agg = A @ x   (MXU)
        agg = jnp.dot(A, x, preferred_element_type=jnp.float32)
        # cat([agg, x], dim=1) @ W + b  ==  agg @ W[:d] + x @ W[d:] + b
        # (split-weight form: agg multiplies the FIRST half of W, matching the
        #  reference cat order [agg_feats, features])
        out = (
            jnp.dot(agg, wa_ref[...], preferred_element_type=jnp.float32)
            + jnp.dot(x, wx_ref[...], preferred_element_type=jnp.float32)
            + b_ref[...]
        )
        return jnp.maximum(out, 0.0)  # ReLU

    x = gconv(x_ref[...], w1a_ref, w1x_ref, b1_ref)
    x = gconv(x, w2a_ref, w2x_ref, b2_ref)
    x = gconv(x, w3a_ref, w3x_ref, b3_ref)
    x = gconv(x, w4a_ref, w4x_ref, b4_ref)

    # classifier: Linear(L, L) -> PReLU(L) -> Linear(L, C) -> sigmoid
    h = jnp.dot(x, fc1w_ref[...], preferred_element_type=jnp.float32) + fc1b_ref[...]
    h = jnp.where(h >= 0.0, h, alpha_ref[...] * h)
    out = jnp.dot(h, fc2w_ref[...], preferred_element_type=jnp.float32) + fc2b_ref[...]
    o_ref[...] = jax.nn.sigmoid(out)  # squeeze happens in the wrapper


# ---------------------------------------------------------------------------
# Wrapper: one pallas_call for the whole network
# ---------------------------------------------------------------------------
def net_forward(params, x, A):
    n = x.shape[0]
    c = params["fc2_w"].shape[1]
    vmem = pl.BlockSpec(memory_space=pltpu.MemorySpace.VMEM)
    args = (
        A, x,
        params["gc1_w_agg"], params["gc1_w_self"], params["gc1_b"],
        params["gc2_w_agg"], params["gc2_w_self"], params["gc2_b"],
        params["gc3_w_agg"], params["gc3_w_self"], params["gc3_b"],
        params["gc4_w_agg"], params["gc4_w_self"], params["gc4_b"],
        params["fc1_w"], params["fc1_b"], params["prelu_alpha"],
        params["fc2_w"], params["fc2_b"],
    )
    pred = pl.pallas_call(
        net_kernel,
        out_shape=jax.ShapeDtypeStruct((n, c), jnp.float32),
        in_specs=[vmem] * len(args),
        out_specs=vmem,
    )(*args)
    # torch .squeeze(): drop size-1 dims (output_channels == 1 -> (N,))
    return jnp.squeeze(pred)
    # TODO(synk): if many graphs are processed, add a leading batch grid axis
    # marked "parallel" (megacore on v7x) instead of calling per graph.


# ---------------------------------------------------------------------------
# Parameter construction (deterministic, xavier-uniform style).
# GraphConv weights are built as (2*in, out) like the PyTorch module, then
# pre-split into the agg-half and self-half; biases/alpha pre-reshaped to 2-D.
# ---------------------------------------------------------------------------
def xavier_uniform(key, shape):
    fan_in, fan_out = shape
    bound = (6.0 / (fan_in + fan_out)) ** 0.5
    return jax.random.uniform(key, shape, jnp.float32, -bound, bound)


def make_params(key, input_channels, layers, output_channels):
    keys = jax.random.split(key, 8)

    def gc(key, in_dim, out_dim):
        w = xavier_uniform(key, (2 * in_dim, out_dim))
        return w[:in_dim], w[in_dim:], jnp.zeros((1, out_dim), jnp.float32)

    gc1_wa, gc1_wx, gc1_b = gc(keys[0], input_channels, input_channels)
    gc2_wa, gc2_wx, gc2_b = gc(keys[1], input_channels, input_channels)
    gc3_wa, gc3_wx, gc3_b = gc(keys[2], input_channels, layers)
    gc4_wa, gc4_wx, gc4_b = gc(keys[3], layers, layers)

    params = {
        "gc1_w_agg": gc1_wa, "gc1_w_self": gc1_wx, "gc1_b": gc1_b,
        "gc2_w_agg": gc2_wa, "gc2_w_self": gc2_wx, "gc2_b": gc2_b,
        "gc3_w_agg": gc3_wa, "gc3_w_self": gc3_wx, "gc3_b": gc3_b,
        "gc4_w_agg": gc4_wa, "gc4_w_self": gc4_wx, "gc4_b": gc4_b,
        # classifier: Linear(L,L) -> PReLU(L) -> Linear(L,C)
        # (stored pre-transposed as (in, out) so kernel does x @ W)
        "fc1_w": xavier_uniform(keys[4], (layers, layers)),
        "fc1_b": jax.random.uniform(keys[5], (1, layers), jnp.float32, -0.1, 0.1),
        "prelu_alpha": jnp.full((1, layers), 0.25, jnp.float32),  # PReLU default
        "fc2_w": xavier_uniform(keys[6], (layers, output_channels)),
        "fc2_b": jax.random.uniform(keys[7], (1, output_channels), jnp.float32, -0.1, 0.1),
    }
    return params


# ---------------------------------------------------------------------------
# Pure-JAX reference (mirrors the PyTorch module) for a correctness check
# ---------------------------------------------------------------------------
def net_reference(params, x, A):
    def gconv(x, wa, wx, b):
        agg = A @ x
        cat = jnp.concatenate([agg, x], axis=1)
        w = jnp.concatenate([wa, wx], axis=0)
        return jnp.maximum(cat @ w + b, 0.0)

    x = gconv(x, params["gc1_w_agg"], params["gc1_w_self"], params["gc1_b"])
    x = gconv(x, params["gc2_w_agg"], params["gc2_w_self"], params["gc2_b"])
    x = gconv(x, params["gc3_w_agg"], params["gc3_w_self"], params["gc3_b"])
    x = gconv(x, params["gc4_w_agg"], params["gc4_w_self"], params["gc4_b"])
    h = x @ params["fc1_w"] + params["fc1_b"]
    h = jnp.where(h >= 0.0, h, params["prelu_alpha"] * h)
    out = h @ params["fc2_w"] + params["fc2_b"]
    return jnp.squeeze(jax.nn.sigmoid(out))


# ---------------------------------------------------------------------------
if __name__ == "__main__":
    key = jax.random.PRNGKey(0)
    k_x, k_a, k_p = jax.random.split(key, 3)

    n_nodes = 16
    input_channels = 8
    layers = 16          # args['layers']
    output_channels = 1

    # node features (N, D)
    x = jax.random.normal(k_x, (n_nodes, input_channels), jnp.float32)
    # row-normalized adjacency with self-loop (mean aggregation semantics)
    a_raw = (jax.random.uniform(k_a, (n_nodes, n_nodes)) > 0.5).astype(jnp.float32)
    a_raw = a_raw + jnp.eye(n_nodes, dtype=jnp.float32)
    A = a_raw / jnp.sum(a_raw, axis=1, keepdims=True)

    params = make_params(k_p, input_channels, layers, output_channels)

    pred = net_forward(params, x, A)
    jax.block_until_ready(pred)

    assert pred.shape == (n_nodes,), pred.shape
    assert bool(jnp.all(jnp.isfinite(pred)))

    ref = net_reference(params, x, A)
    assert bool(jnp.allclose(pred, ref, atol=1e-5, rtol=1e-5))

    print("KERNEL_OK")
</pallas_src>

<mosaic_0001>
module attributes {stable_mosaic.version = 11 : i64} {
  func.func @net_kernel(%arg0: memref<16x16xf32, #tpu.memory_space<vmem>>, %arg1: memref<16x8xf32, #tpu.memory_space<vmem>>, %arg2: memref<8x8xf32, #tpu.memory_space<vmem>>, %arg3: memref<8x8xf32, #tpu.memory_space<vmem>>, %arg4: memref<1x8xf32, #tpu.memory_space<vmem>>, %arg5: memref<8x8xf32, #tpu.memory_space<vmem>>, %arg6: memref<8x8xf32, #tpu.memory_space<vmem>>, %arg7: memref<1x8xf32, #tpu.memory_space<vmem>>, %arg8: memref<8x16xf32, #tpu.memory_space<vmem>>, %arg9: memref<8x16xf32, #tpu.memory_space<vmem>>, %arg10: memref<1x16xf32, #tpu.memory_space<vmem>>, %arg11: memref<16x16xf32, #tpu.memory_space<vmem>>, %arg12: memref<16x16xf32, #tpu.memory_space<vmem>>, %arg13: memref<1x16xf32, #tpu.memory_space<vmem>>, %arg14: memref<16x16xf32, #tpu.memory_space<vmem>>, %arg15: memref<1x16xf32, #tpu.memory_space<vmem>>, %arg16: memref<1x16xf32, #tpu.memory_space<vmem>>, %arg17: memref<16x1xf32, #tpu.memory_space<vmem>>, %arg18: memref<1x1xf32, #tpu.memory_space<vmem>>, %arg19: memref<16x1xf32, #tpu.memory_space<vmem>>) attributes {dimension_semantics = [], scalar_prefetch = 0 : i64, scratch_operands = 0 : i64, tpu.core_type = #tpu.core_type<tc>} {
    %c0 = arith.constant 0 : index
    %c0_0 = arith.constant 0 : index
    %0 = vector.load %arg0[%c0, %c0_0] : memref<16x16xf32, #tpu.memory_space<vmem>>, vector<16x16xf32>
    %c0_1 = arith.constant 0 : index
    %c0_2 = arith.constant 0 : index
    %1 = vector.load %arg1[%c0_1, %c0_2] : memref<16x8xf32, #tpu.memory_space<vmem>>, vector<16x8xf32>
    %cst = arith.constant dense<0.000000e+00> : vector<16x8xf32>
    %2 = tpu.matmul %0, %1, %cst {dimension_numbers = #tpu.dot_dimension_numbers<[1], [0], [0], [1], [0, 0, 1, 1], [], []>} : vector<16x16xf32>, vector<16x8xf32>, vector<16x8xf32> -> vector<16x8xf32>
    %c0_3 = arith.constant 0 : index
    %c0_4 = arith.constant 0 : index
    %3 = vector.load %arg2[%c0_3, %c0_4] : memref<8x8xf32, #tpu.memory_space<vmem>>, vector<8x8xf32>
    %cst_5 = arith.constant dense<0.000000e+00> : vector<16x8xf32>
    %4 = tpu.matmul %2, %3, %cst_5 {dimension_numbers = #tpu.dot_dimension_numbers<[1], [0], [0], [1], [0, 0, 1, 1], [], []>} : vector<16x8xf32>, vector<8x8xf32>, vector<16x8xf32> -> vector<16x8xf32>
    %c0_6 = arith.constant 0 : index
    %c0_7 = arith.constant 0 : index
    %5 = vector.load %arg3[%c0_6, %c0_7] : memref<8x8xf32, #tpu.memory_space<vmem>>, vector<8x8xf32>
    %cst_8 = arith.constant dense<0.000000e+00> : vector<16x8xf32>
    %6 = tpu.matmul %1, %5, %cst_8 {dimension_numbers = #tpu.dot_dimension_numbers<[1], [0], [0], [1], [0, 0, 1, 1], [], []>} : vector<16x8xf32>, vector<8x8xf32>, vector<16x8xf32> -> vector<16x8xf32>
    %7 = arith.addf %4, %6 : vector<16x8xf32>
    %c0_9 = arith.constant 0 : index
    %c0_10 = arith.constant 0 : index
    %8 = vector.load %arg4[%c0_9, %c0_10] : memref<1x8xf32, #tpu.memory_space<vmem>>, vector<1x8xf32>
    %9 = vector.broadcast %8 : vector<1x8xf32> to vector<16x8xf32>
    %10 = arith.addf %7, %9 : vector<16x8xf32>
    %cst_11 = arith.constant 0.000000e+00 : f32
    %11 = vector.broadcast %cst_11 : f32 to vector<16x8xf32>
    %12 = arith.maximumf %10, %11 : vector<16x8xf32>
    %cst_12 = arith.constant dense<0.000000e+00> : vector<16x8xf32>
    %13 = tpu.matmul %0, %12, %cst_12 {dimension_numbers = #tpu.dot_dimension_numbers<[1], [0], [0], [1], [0, 0, 1, 1], [], []>} : vector<16x16xf32>, vector<16x8xf32>, vector<16x8xf32> -> vector<16x8xf32>
    %c0_13 = arith.constant 0 : index
    %c0_14 = arith.constant 0 : index
    %14 = vector.load %arg5[%c0_13, %c0_14] : memref<8x8xf32, #tpu.memory_space<vmem>>, vector<8x8xf32>
    %cst_15 = arith.constant dense<0.000000e+00> : vector<16x8xf32>
    %15 = tpu.matmul %13, %14, %cst_15 {dimension_numbers = #tpu.dot_dimension_numbers<[1], [0], [0], [1], [0, 0, 1, 1], [], []>} : vector<16x8xf32>, vector<8x8xf32>, vector<16x8xf32> -> vector<16x8xf32>
    %c0_16 = arith.constant 0 : index
    %c0_17 = arith.constant 0 : index
    %16 = vector.load %arg6[%c0_16, %c0_17] : memref<8x8xf32, #tpu.memory_space<vmem>>, vector<8x8xf32>
    %cst_18 = arith.constant dense<0.000000e+00> : vector<16x8xf32>
    %17 = tpu.matmul %12, %16, %cst_18 {dimension_numbers = #tpu.dot_dimension_numbers<[1], [0], [0], [1], [0, 0, 1, 1], [], []>} : vector<16x8xf32>, vector<8x8xf32>, vector<16x8xf32> -> vector<16x8xf32>
    %18 = arith.addf %15, %17 : vector<16x8xf32>
    %c0_19 = arith.constant 0 : index
    %c0_20 = arith.constant 0 : index
    %19 = vector.load %arg7[%c0_19, %c0_20] : memref<1x8xf32, #tpu.memory_space<vmem>>, vector<1x8xf32>
    %20 = vector.broadcast %19 : vector<1x8xf32> to vector<16x8xf32>
    %21 = arith.addf %18, %20 : vector<16x8xf32>
    %cst_21 = arith.constant 0.000000e+00 : f32
    %22 = vector.broadcast %cst_21 : f32 to vector<16x8xf32>
    %23 = arith.maximumf %21, %22 : vector<16x8xf32>
    %cst_22 = arith.constant dense<0.000000e+00> : vector<16x8xf32>
    %24 = tpu.matmul %0, %23, %cst_22 {dimension_numbers = #tpu.dot_dimension_numbers<[1], [0], [0], [1], [0, 0, 1, 1], [], []>} : vector<16x16xf32>, vector<16x8xf32>, vector<16x8xf32> -> vector<16x8xf32>
    %c0_23 = arith.constant 0 : index
    %c0_24 = arith.constant 0 : index
    %25 = vector.load %arg8[%c0_23, %c0_24] : memref<8x16xf32, #tpu.memory_space<vmem>>, vector<8x16xf32>
    %cst_25 = arith.constant dense<0.000000e+00> : vector<16x16xf32>
    %26 = tpu.matmul %24, %25, %cst_25 {dimension_numbers = #tpu.dot_dimension_numbers<[1], [0], [0], [1], [0, 0, 1, 1], [], []>} : vector<16x8xf32>, vector<8x16xf32>, vector<16x16xf32> -> vector<16x16xf32>
    %c0_26 = arith.constant 0 : index
    %c0_27 = arith.constant 0 : index
    %27 = vector.load %arg9[%c0_26, %c0_27] : memref<8x16xf32, #tpu.memory_space<vmem>>, vector<8x16xf32>
    %cst_28 = arith.constant dense<0.000000e+00> : vector<16x16xf32>
    %28 = tpu.matmul %23, %27, %cst_28 {dimension_numbers = #tpu.dot_dimension_numbers<[1], [0], [0], [1], [0, 0, 1, 1], [], []>} : vector<16x8xf32>, vector<8x16xf32>, vector<16x16xf32> -> vector<16x16xf32>
    %29 = arith.addf %26, %28 : vector<16x16xf32>
    %c0_29 = arith.constant 0 : index
    %c0_30 = arith.constant 0 : index
    %30 = vector.load %arg10[%c0_29, %c0_30] : memref<1x16xf32, #tpu.memory_space<vmem>>, vector<1x16xf32>
    %31 = vector.broadcast %30 : vector<1x16xf32> to vector<16x16xf32>
    %32 = arith.addf %29, %31 : vector<16x16xf32>
    %cst_31 = arith.constant 0.000000e+00 : f32
    %33 = vector.broadcast %cst_31 : f32 to vector<16x16xf32>
    %34 = arith.maximumf %32, %33 : vector<16x16xf32>
    %cst_32 = arith.constant dense<0.000000e+00> : vector<16x16xf32>
    %35 = tpu.matmul %0, %34, %cst_32 {dimension_numbers = #tpu.dot_dimension_numbers<[1], [0], [0], [1], [0, 0, 1, 1], [], []>} : vector<16x16xf32>, vector<16x16xf32>, vector<16x16xf32> -> vector<16x16xf32>
    %c0_33 = arith.constant 0 : index
    %c0_34 = arith.constant 0 : index
    %36 = vector.load %arg11[%c0_33, %c0_34] : memref<16x16xf32, #tpu.memory_space<vmem>>, vector<16x16xf32>
    %cst_35 = arith.constant dense<0.000000e+00> : vector<16x16xf32>
    %37 = tpu.matmul %35, %36, %cst_35 {dimension_numbers = #tpu.dot_dimension_numbers<[1], [0], [0], [1], [0, 0, 1, 1], [], []>} : vector<16x16xf32>, vector<16x16xf32>, vector<16x16xf32> -> vector<16x16xf32>
    %c0_36 = arith.constant 0 : index
    %c0_37 = arith.constant 0 : index
    %38 = vector.load %arg12[%c0_36, %c0_37] : memref<16x16xf32, #tpu.memory_space<vmem>>, vector<16x16xf32>
    %cst_38 = arith.constant dense<0.000000e+00> : vector<16x16xf32>
    %39 = tpu.matmul %34, %38, %cst_38 {dimension_numbers = #tpu.dot_dimension_numbers<[1], [0], [0], [1], [0, 0, 1, 1], [], []>} : vector<16x16xf32>, vector<16x16xf32>, vector<16x16xf32> -> vector<16x16xf32>
    %40 = arith.addf %37, %39 : vector<16x16xf32>
    %c0_39 = arith.constant 0 : index
    %c0_40 = arith.constant 0 : index
    %41 = vector.load %arg13[%c0_39, %c0_40] : memref<1x16xf32, #tpu.memory_space<vmem>>, vector<1x16xf32>
    %42 = vector.broadcast %41 : vector<1x16xf32> to vector<16x16xf32>
    %43 = arith.addf %40, %42 : vector<16x16xf32>
    %cst_41 = arith.constant 0.000000e+00 : f32
    %44 = vector.broadcast %cst_41 : f32 to vector<16x16xf32>
    %45 = arith.maximumf %43, %44 : vector<16x16xf32>
    %c0_42 = arith.constant 0 : index
    %c0_43 = arith.constant 0 : index
    %46 = vector.load %arg14[%c0_42, %c0_43] : memref<16x16xf32, #tpu.memory_space<vmem>>, vector<16x16xf32>
    %cst_44 = arith.constant dense<0.000000e+00> : vector<16x16xf32>
    %47 = tpu.matmul %45, %46, %cst_44 {dimension_numbers = #tpu.dot_dimension_numbers<[1], [0], [0], [1], [0, 0, 1, 1], [], []>} : vector<16x16xf32>, vector<16x16xf32>, vector<16x16xf32> -> vector<16x16xf32>
    %c0_45 = arith.constant 0 : index
    %c0_46 = arith.constant 0 : index
    %48 = vector.load %arg15[%c0_45, %c0_46] : memref<1x16xf32, #tpu.memory_space<vmem>>, vector<1x16xf32>
    %49 = vector.broadcast %48 : vector<1x16xf32> to vector<16x16xf32>
    %50 = arith.addf %47, %49 : vector<16x16xf32>
    %cst_47 = arith.constant 0.000000e+00 : f32
    %51 = vector.broadcast %cst_47 : f32 to vector<16x16xf32>
    %52 = arith.cmpf oge, %50, %51 : vector<16x16xf32>
    %c0_48 = arith.constant 0 : index
    %c0_49 = arith.constant 0 : index
    %53 = vector.load %arg16[%c0_48, %c0_49] : memref<1x16xf32, #tpu.memory_space<vmem>>, vector<1x16xf32>
    %54 = vector.broadcast %53 : vector<1x16xf32> to vector<16x16xf32>
    %55 = arith.mulf %54, %50 : vector<16x16xf32>
    %56 = arith.select %52, %50, %55 : vector<16x16xi1>, vector<16x16xf32>
    %c0_50 = arith.constant 0 : index
    %c0_51 = arith.constant 0 : index
    %57 = vector.load %arg17[%c0_50, %c0_51] : memref<16x1xf32, #tpu.memory_space<vmem>>, vector<16x1xf32>
    %cst_52 = arith.constant dense<0.000000e+00> : vector<16x1xf32>
    %58 = tpu.matmul %56, %57, %cst_52 {dimension_numbers = #tpu.dot_dimension_numbers<[1], [0], [0], [1], [0, 0, 1, 1], [], []>} : vector<16x16xf32>, vector<16x1xf32>, vector<16x1xf32> -> vector<16x1xf32>
    %c0_53 = arith.constant 0 : index
    %c0_54 = arith.constant 0 : index
    %59 = vector.load %arg18[%c0_53, %c0_54] : memref<1x1xf32, #tpu.memory_space<vmem>>, vector<1x1xf32>
    %60 = vector.broadcast %59 : vector<1x1xf32> to vector<16x1xf32>
    %61 = arith.addf %58, %60 : vector<16x1xf32>
    %62 = arith.negf %61 : vector<16x1xf32>
    %63 = math.exp %62 : vector<16x1xf32>
    %cst_55 = arith.constant 1.000000e+00 : f32
    %64 = vector.broadcast %cst_55 : f32 to vector<16x1xf32>
    %65 = arith.addf %64, %63 : vector<16x1xf32>
    %66 = arith.divf %64, %65 : vector<16x1xf32>
    %c0_56 = arith.constant 0 : index
    %c0_57 = arith.constant 0 : index
    %67 = vector.load %arg19[%c0_56, %c0_57] : memref<16x1xf32, #tpu.memory_space<vmem>>, vector<16x1xf32>
    tpu.vector_store %arg19[%c0_56, %c0_57], %66 {strides = array<i32>} : memref<16x1xf32, #tpu.memory_space<vmem>>, vector<16x1xf32>,
    return
  }
}

</mosaic_0001>

<llo_original>
// kernel: tpu_custom_call.1
$region0: #{tpu_custom_call.1}
  #allocation0 [shape = 'u32[]', space=smem, size = 0x4, offset = 0x4, fixed_abs, tag = 'smem constant byte address 0x4 - core index']
  #allocation1 [shape = 'u32[144,128]{1,0:T(1,128)}', space=vmem, size = 0x12000, scoped, tag = 'internal scratch']
  #allocation2 [shape = 'f32[1,1]{1,0:T(1,128)S(1)}', space=vmem, size = 0x200, scoped, tag = 'scoped memory for tpu_custom_call.1']
  %s0 = inlined_call_operand.vmem [shape: f32[16,16], index: 0, kind: input, shape index: {}]
  %s1 = inlined_call_operand.vmem [shape: f32[16,8], index: 1, kind: input, shape index: {}]
  %s2 = inlined_call_operand.hbm [shape: f32[8,8], index: 2, kind: input, shape index: {}]
  %s3 = inlined_call_operand.hbm [shape: f32[8,8], index: 3, kind: input, shape index: {}]
  %s4 = inlined_call_operand.vmem [shape: f32[1,8], index: 4, kind: input, shape index: {}]
  %s5 = inlined_call_operand.hbm [shape: f32[8,8], index: 5, kind: input, shape index: {}]
  %s6 = inlined_call_operand.hbm [shape: f32[8,8], index: 6, kind: input, shape index: {}]
  %s7 = inlined_call_operand.vmem [shape: f32[1,8], index: 7, kind: input, shape index: {}]
  %s8 = inlined_call_operand.vmem [shape: f32[8,16], index: 8, kind: input, shape index: {}]
  %s9 = inlined_call_operand.hbm [shape: f32[8,16], index: 9, kind: input, shape index: {}]
  %s10 = inlined_call_operand.vmem [shape: f32[1,16], index: 10, kind: input, shape index: {}]
  %s11 = inlined_call_operand.vmem [shape: f32[16,16], index: 11, kind: input, shape index: {}]
  %s12 = inlined_call_operand.vmem [shape: f32[16,16], index: 12, kind: input, shape index: {}]
  %s13 = inlined_call_operand.vmem [shape: f32[1,16], index: 13, kind: input, shape index: {}]
  %s14 = inlined_call_operand.vmem [shape: f32[16,16], index: 14, kind: input, shape index: {}]
  %s15 = inlined_call_operand.vmem [shape: f32[1,16], index: 15, kind: input, shape index: {}]
  %s16 = inlined_call_operand.vmem [shape: f32[1,16], index: 16, kind: input, shape index: {}]
  %s17 = inlined_call_operand.vmem [shape: f32[16,1], index: 17, kind: input, shape index: {}]
  %s18 = inlined_call_operand.<no memory space> [shape: f32[1,1], index: 18, kind: input, shape index: {}]
  %s19 = inlined_call_operand.vmem [shape: f32[16,1], index: 19, kind: output, shape index: {}]
  %s20 = sld [smem:[#allocation0]]
  $region106: #{tpu_custom_call.1} parent=0
    _
  %s22 = ssub.s32 1, %s20
  %s23 = scalar_select 0, %s22, %s20
  %v24 = vstv %s18
  %25 = vst [vmem:[#allocation2] sm:$0x1] %v24
  $region1: #{tpu_custom_call.1} parent=0
    #allocation3 [shape = 'u8[4096]{0}', space=vmem, size = 0x1000, scoped, tag = 'input window, operand 2, single buffered']
    #allocation4 [shape = 's32[1]{0}', space=sflag, size = 0x4, scoped, tag = 'scoped memory for tpu_custom_call.1']
    #allocation5 [shape = 'u8[4096]{0}', space=vmem, size = 0x1000, scoped, tag = 'input window, operand 3, single buffered']
    #allocation6 [shape = 's32[1]{0}', space=sflag, size = 0x4, scoped, tag = 'scoped memory for tpu_custom_call.1']
    #allocation7 [shape = 'u8[4096]{0}', space=vmem, size = 0x1000, scoped, tag = 'input window, operand 5, single buffered']
    #allocation8 [shape = 'u8[4096]{0}', space=vmem, size = 0x1000, scoped, tag = 'input window, operand 6, single buffered']
    #allocation9 [shape = 's32[1]{0}', space=sflag, size = 0x4, scoped, tag = 'scoped memory for tpu_custom_call.1']
    #allocation10 [shape = 'u8[4096]{0}', space=vmem, size = 0x1000, scoped, tag = 'input window, operand 9, single buffered']
    %26 = vsyncpa [#allocation4], 0
    %27 = vsyncpa [#allocation6], 0
    %28 = vsyncpa [#allocation9], 0
    // Predicated region
    $region2: #{tpu_custom_call.1} parent=1 // pred_check
      _
    $region3: #{tpu_custom_call.1} parent=1 // pred_check_branch
      %30 = sbr.rel (0) target = $region5
    $region4: #{tpu_custom_call.1} parent=1 // pred_region
      _
    $region5: #{tpu_custom_call.1} parent=1 // pred_fallthru
      _
    // Predicated region
    $region6: #{tpu_custom_call.1} parent=1 // pred_check
      _
    $region7: #{tpu_custom_call.1} parent=1 // pred_check_branch
      %32 = sbr.rel (0) target = $region9
    $region8: #{tpu_custom_call.1} parent=1 // pred_region
      _
    $region9: #{tpu_custom_call.1} parent=1 // pred_fallthru
      _
    // Predicated region
    $region10: #{tpu_custom_call.1} parent=1 // pred_check
      _
    $region11: #{tpu_custom_call.1} parent=1 // pred_check_branch
      %34 = sbr.rel (0) target = $region13
    $region12: #{tpu_custom_call.1} parent=1 // pred_region
      %s36 = ssub.s32 128, 128
      %37 = vsyncadd [#allocation4], %s36
      %s39 = sshll.u32 [#allocation3], 4
      %s40 = int_to_ptr.vmem [resolvable:$true] %s39
      %42 = dma.hbm_to_vmem [thread:$0]  %s2, 128, %s40, [#allocation4]
    $region13: #{tpu_custom_call.1} parent=1 // pred_fallthru
      _
    // Predicated region
    $region14: #{tpu_custom_call.1} parent=1 // pred_check
      _
    $region15: #{tpu_custom_call.1} parent=1 // pred_check_branch
      %44 = sbr.rel (0) target = $region17
    $region16: #{tpu_custom_call.1} parent=1 // pred_region
      %s46 = ssub.s32 128, 128
      %47 = vsyncadd [#allocation6], %s46
      %s49 = sshll.u32 [#allocation5], 4
      %s50 = int_to_ptr.vmem [resolvable:$true] %s49
      %52 = dma.hbm_to_vmem [thread:$0]  %s3, 128, %s50, [#allocation6]
    $region17: #{tpu_custom_call.1} parent=1 // pred_fallthru
      _
    // Predicated region
    $region18: #{tpu_custom_call.1} parent=1 // pred_check
      _
    $region19: #{tpu_custom_call.1} parent=1 // pred_check_branch
      %54 = sbr.rel (0) target = $region21
    $region20: #{tpu_custom_call.1} parent=1 // pred_region
      _
    $region21: #{tpu_custom_call.1} parent=1 // pred_fallthru
      _
    // Predicated region
    $region22: #{tpu_custom_call.1} parent=1 // pred_check
      _
    $region23: #{tpu_custom_call.1} parent=1 // pred_check_branch
      %56 = sbr.rel (0) target = $region25
    $region24: #{tpu_custom_call.1} parent=1 // pred_region
      %s58 = ssub.s32 128, 128
      %59 = vsyncadd [#allocation6], %s58
      %s61 = sshll.u32 [#allocation7], 4
      %s62 = int_to_ptr.vmem [resolvable:$true] %s61
      %64 = dma.hbm_to_vmem [thread:$0]  %s5, 128, %s62, [#allocation6]
    $region25: #{tpu_custom_call.1} parent=1 // pred_fallthru
      _
    // Predicated region
    $region26: #{tpu_custom_call.1} parent=1 // pred_check
      _
    $region27: #{tpu_custom_call.1} parent=1 // pred_check_branch
      %66 = sbr.rel (0) target = $region29
    $region28: #{tpu_custom_call.1} parent=1 // pred_region
      %s68 = ssub.s32 128, 128
      %69 = vsyncadd [#allocation9], %s68
      %s71 = sshll.u32 [#allocation8], 4
      %s72 = int_to_ptr.vmem [resolvable:$true] %s71
      %74 = dma.hbm_to_vmem [thread:$0]  %s6, 128, %s72, [#allocation9]
    $region29: #{tpu_custom_call.1} parent=1 // pred_fallthru
      _
    // Predicated region
    $region30: #{tpu_custom_call.1} parent=1 // pred_check
      _
    $region31: #{tpu_custom_call.1} parent=1 // pred_check_branch
      %76 = sbr.rel (0) target = $region33
    $region32: #{tpu_custom_call.1} parent=1 // pred_region
      _
    $region33: #{tpu_custom_call.1} parent=1 // pred_fallthru
      _
    // Predicated region
    $region34: #{tpu_custom_call.1} parent=1 // pred_check
      _
    $region35: #{tpu_custom_call.1} parent=1 // pred_check_branch
      %78 = sbr.rel (0) target = $region37
    $region36: #{tpu_custom_call.1} parent=1 // pred_region
      _
    $region37: #{tpu_custom_call.1} parent=1 // pred_fallthru
      _
    // Predicated region
    $region38: #{tpu_custom_call.1} parent=1 // pred_check
      _
    $region39: #{tpu_custom_call.1} parent=1 // pred_check_branch
      %80 = sbr.rel (0) target = $region41
    $region40: #{tpu_custom_call.1} parent=1 // pred_region
      %s82 = ssub.s32 128, 128
      %83 = vsyncadd [#allocation9], %s82
      %s85 = sshll.u32 [#allocation10], 4
      %s86 = int_to_ptr.vmem [resolvable:$true] %s85
      %88 = dma.hbm_to_vmem [thread:$0]  %s9, 128, %s86, [#allocation9]
    $region41: #{tpu_custom_call.1} parent=1 // pred_fallthru
      _
    // Predicated region
    $region42: #{tpu_custom_call.1} parent=1 // pred_check
      _
    $region43: #{tpu_custom_call.1} parent=1 // pred_check_branch
      %90 = sbr.rel (0) target = $region45
    $region44: #{tpu_custom_call.1} parent=1 // pred_region
      _
    $region45: #{tpu_custom_call.1} parent=1 // pred_fallthru
      _
    // Predicated region
    $region46: #{tpu_custom_call.1} parent=1 // pred_check
      _
    $region47: #{tpu_custom_call.1} parent=1 // pred_check_branch
      %92 = sbr.rel (0) target = $region49
    $region48: #{tpu_custom_call.1} parent=1 // pred_region
      _
    $region49: #{tpu_custom_call.1} parent=1 // pred_fallthru
      _
    // Predicated region
    $region50: #{tpu_custom_call.1} parent=1 // pred_check
      _
    $region51: #{tpu_custom_call.1} parent=1 // pred_check_branch
      %94 = sbr.rel (0) target = $region53
    $region52: #{tpu_custom_call.1} parent=1 // pred_region
      _
    $region53: #{tpu_custom_call.1} parent=1 // pred_fallthru
      _
    // Predicated region
    $region54: #{tpu_custom_call.1} parent=1 // pred_check
      _
    $region55: #{tpu_custom_call.1} parent=1 // pred_check_branch
      %96 = sbr.rel (0) target = $region57
    $region56: #{tpu_custom_call.1} parent=1 // pred_region
      _
    $region57: #{tpu_custom_call.1} parent=1 // pred_fallthru
      _
    // Predicated region
    $region58: #{tpu_custom_call.1} parent=1 // pred_check
      _
    $region59: #{tpu_custom_call.1} parent=1 // pred_check_branch
      %98 = sbr.rel (0) target = $region61
    $region60: #{tpu_custom_call.1} parent=1 // pred_region
      _
    $region61: #{tpu_custom_call.1} parent=1 // pred_fallthru
      _
    // Predicated region
    $region62: #{tpu_custom_call.1} parent=1 // pred_check
      _
    $region63: #{tpu_custom_call.1} parent=1 // pred_check_branch
      %100 = sbr.rel (0) target = $region65
    $region64: #{tpu_custom_call.1} parent=1 // pred_region
      _
    $region65: #{tpu_custom_call.1} parent=1 // pred_fallthru
      _
    // Predicated region
    $region66: #{tpu_custom_call.1} parent=1 // pred_check
      _
    $region67: #{tpu_custom_call.1} parent=1 // pred_check_branch
      %102 = sbr.rel (0) target = $region69
    $region68: #{tpu_custom_call.1} parent=1 // pred_region
      _
    $region69: #{tpu_custom_call.1} parent=1 // pred_fallthru
      _
    // Predicated region
    $region70: #{tpu_custom_call.1} parent=1 // pred_check
      _
    $region71: #{tpu_custom_call.1} parent=1 // pred_check_branch
      %104 = sbr.rel (0) target = $region73
    $region72: #{tpu_custom_call.1} parent=1 // pred_region
      _
    $region73: #{tpu_custom_call.1} parent=1 // pred_fallthru
      _
    // Predicated region
    $region74: #{tpu_custom_call.1} parent=1 // pred_check
      _
    $region75: #{tpu_custom_call.1} parent=1 // pred_check_branch
      %106 = sbr.rel (0) target = $region77
    $region76: #{tpu_custom_call.1} parent=1 // pred_region
      _
    $region77: #{tpu_custom_call.1} parent=1 // pred_fallthru
      _
    // Predicated region
    $region78: #{tpu_custom_call.1} parent=1 // pred_check
      _
    $region79: #{tpu_custom_call.1} parent=1 // pred_check_branch
      %108 = sbr.rel (0) target = $region81
    $region80: #{tpu_custom_call.1} parent=1 // pred_region
      %109 = dma.done [#allocation4], 128
    $region81: #{tpu_custom_call.1} parent=1 // pred_fallthru
      _
    // Predicated region
    $region82: #{tpu_custom_call.1} parent=1 // pred_check
      _
    $region83: #{tpu_custom_call.1} parent=1 // pred_check_branch
      %111 = sbr.rel (0) target = $region85
    $region84: #{tpu_custom_call.1} parent=1 // pred_region
      %112 = dma.done [#allocation6], 128
    $region85: #{tpu_custom_call.1} parent=1 // pred_fallthru
      _
    // Predicated region
    $region86: #{tpu_custom_call.1} parent=1 // pred_check
      _
    $region87: #{tpu_custom_call.1} parent=1 // pred_check_branch
      %114 = sbr.rel (0) target = $region89
    $region88: #{tpu_custom_call.1} parent=1 // pred_region
      %115 = dma.done [#allocation6], 128
    $region89: #{tpu_custom_call.1} parent=1 // pred_fallthru
      _
    // Predicated region
    $region90: #{tpu_custom_call.1} parent=1 // pred_check
      _
    $region91: #{tpu_custom_call.1} parent=1 // pred_check_branch
      %117 = sbr.rel (0) target = $region93
    $region92: #{tpu_custom_call.1} parent=1 // pred_region
      %118 = dma.done [#allocation9], 128
    $region93: #{tpu_custom_call.1} parent=1 // pred_fallthru
      _
    // Predicated region
    $region94: #{tpu_custom_call.1} parent=1 // pred_check
      _
    $region95: #{tpu_custom_call.1} parent=1 // pred_check_branch
      %120 = sbr.rel (0) target = $region97
    $region96: #{tpu_custom_call.1} parent=1 // pred_region
      %121 = dma.done [#allocation9], 128
    $region97: #{tpu_custom_call.1} parent=1 // pred_fallthru
      _
    %v122 = vld [vmem:[%s0] sm:$0xff]
    %v123 = vld [vmem:[%s0 + $0x8] sm:$0xff]
    %v124 = vld [vmem:[%s1] sm:$0xff]
    %v125 = vld [vmem:[%s1 + $0x8] sm:$0xff]
    %vm126 = vcmask 130048
    %v128 = vsel %vm126, %v122, 0
    %v131 = vsel %vm126, %v123, 0
    %133 = vmatprep.subr.mxu0 0.0
    %134 = vmatpush1.msra.mxu0 %v124
    %135 = vmatprep.subr.mxu0 0.0
    %136 = vmatpush1.msra.mxu0 %v125
    %137 = vmatprep.subr.mxu0 0.0
    %138 = vmatpush1.msra.mxu0 0.0
    %139 = vmatprep.subr.mxu0 0.0
    %140 = vmatpush1.msra.mxu0 0.0
    %141 = vmatprep.subr.mxu0 0.0
    %142 = vmatpush1.msra.mxu0 0.0
    %143 = vmatprep.subr.mxu0 0.0
    %144 = vmatpush1.msra.mxu0 0.0
    %145 = vmatprep.subr.mxu0 0.0
    %146 = vmatpush1.msra.mxu0 0.0
    %147 = vmatprep.subr.mxu0 0.0
    %148 = vmatpush1.msra.mxu0 0.0
    %149 = vmatprep.subr.mxu0 0.0
    %150 = vmatpush1.msra.mxu0 0.0
    %151 = vmatprep.subr.mxu0 0.0
    %152 = vmatpush1.msra.mxu0 0.0
    %153 = vmatprep.subr.mxu0 0.0
    %154 = vmatpush1.msra.mxu0 0.0
    %155 = vmatprep.subr.mxu0 0.0
    %156 = vmatpush1.msra.mxu0 0.0
    %157 = vmatprep.subr.mxu0 0.0
    %158 = vmatpush1.msra.mxu0 0.0
    %159 = vmatprep.subr.mxu0 0.0
    %160 = vmatpush1.msra.mxu0 0.0
    %161 = vmatprep.subr.mxu0 0.0
    %162 = vmatpush1.msra.mxu0 0.0
    %163 = vmatprep.subr.mxu0 0.0
    %164 = vmatpush1.msra.mxu0 0.0
    %165 = vmatprep.subr.mxu0 0.0
    %166 = vmatpush1.msra.mxu0 0.0
    %167 = vmatprep.subr.mxu0 0.0
    %168 = vmatpush1.msra.mxu0 0.0
    %169 = vmatprep.subr.mxu0 0.0
    %170 = vmatpush1.msra.mxu0 0.0
    %171 = vmatprep.subr.mxu0 0.0
    %172 = vmatpush1.msra.mxu0 0.0
    %173 = vmatprep.subr.mxu0 0.0
    %174 = vmatpush1.msra.mxu0 0.0
    %175 = vmatprep.subr.mxu0 0.0
    %176 = vmatpush1.msra.mxu0 0.0
    %177 = vmatprep.subr.mxu0 0.0
    %178 = vmatpush1.msra.mxu0 0.0
    %179 = vmatprep.subr.mxu0 0.0
    %180 = vmatpush1.msra.mxu0 0.0
    %181 = vmatprep.subr.mxu0 0.0
    %182 = vmatpush1.msra.mxu0 0.0
    %183 = vmatprep.subr.mxu0 0.0
    %184 = vmatpush1.msra.mxu0 0.0
    %185 = vmatprep.subr.mxu0 0.0
    %186 = vmatpush1.msra.mxu0 0.0
    %187 = vmatprep.subr.mxu0 0.0
    %188 = vmatpush1.msra.mxu0 0.0
    %189 = vmatprep.subr.mxu0 0.0
    %190 = vmatpush1.msra.mxu0 0.0
    %191 = vmatprep.subr.mxu0 0.0
    %192 = vmatpush1.msra.mxu0 0.0
    %193 = vmatprep.subr.mxu0 0.0
    %194 = vmatpush1.msra.mxu0 0.0
    %195 = vmatprep.subr.mxu0 0.0
    %196 = vmatpush1.msra.mxu0 0.0
    %197 = vmatprep.mubr.f32.mxu0 0.0
    %198 = vmatmul.mubr.f32.gmra.mrb[0].mxu0 %v128
    %v199 = vpop.f32.mrb[0].mxu0
    %v200 = vadd.f32 0.0, %v199
    %v201 = vpop.f32.mrb[0].mxu0
    %202 = vmatprep.mubr.f32.mxu0 0.0
    %203 = vmatmul.mubr.f32.gmra.mrb[0].mxu0 %v131
    %v204 = vpop.f32.mrb[0].mxu0
    %v205 = vadd.f32 0.0, %v204
    %v206 = vpop.f32.mrb[0].mxu0
    %207 = vdwg.mxu0
    %v208 = vld [vmem:[#allocation3] sm:$0xff]
    %v209 = vld [vmem:[#allocation5] sm:$0xff]
    %vm210 = vcmask 64512
    %v212 = vsel %vm210, %v124, 0
    %v215 = vsel %vm210, %v125, 0
    %217 = vmatprep.subr.mxu0 0.0
    %218 = vmatpush1.msra.mxu0 %v209
    %219 = vmatprep.subr.mxu0 0.0
    %220 = vmatpush1.msra.mxu0 0.0
    %221 = vmatprep.subr.mxu0 0.0
    %222 = vmatpush1.msra.mxu0 0.0
    %223 = vmatprep.subr.mxu0 0.0
    %224 = vmatpush1.msra.mxu0 0.0
    %225 = vmatprep.subr.mxu0 0.0
    %226 = vmatpush1.msra.mxu0 0.0
    %227 = vmatprep.subr.mxu0 0.0
    %228 = vmatpush1.msra.mxu0 0.0
    %229 = vmatprep.subr.mxu0 0.0
    %230 = vmatpush1.msra.mxu0 0.0
    %231 = vmatprep.subr.mxu0 0.0
    %232 = vmatpush1.msra.mxu0 0.0
    %233 = vmatprep.subr.mxu0 0.0
    %234 = vmatpush1.msra.mxu0 0.0
    %235 = vmatprep.subr.mxu0 0.0
    %236 = vmatpush1.msra.mxu0 0.0
    %237 = vmatprep.subr.mxu0 0.0
    %238 = vmatpush1.msra.mxu0 0.0
    %239 = vmatprep.subr.mxu0 0.0
    %240 = vmatpush1.msra.mxu0 0.0
    %241 = vmatprep.subr.mxu0 0.0
    %242 = vmatpush1.msra.mxu0 0.0
    %243 = vmatprep.subr.mxu0 0.0
    %244 = vmatpush1.msra.mxu0 0.0
    %245 = vmatprep.subr.mxu0 0.0
    %246 = vmatpush1.msra.mxu0 0.0
    %247 = vmatprep.subr.mxu0 0.0
    %248 = vmatpush1.msra.mxu0 0.0
    %249 = vmatprep.subr.mxu0 0.0
    %250 = vmatpush1.msra.mxu0 0.0
    %251 = vmatprep.subr.mxu0 0.0
    %252 = vmatpush1.msra.mxu0 0.0
    %253 = vmatprep.subr.mxu0 0.0
    %254 = vmatpush1.msra.mxu0 0.0
    %255 = vmatprep.subr.mxu0 0.0
    %256 = vmatpush1.msra.mxu0 0.0
    %257 = vmatprep.subr.mxu0 0.0
    %258 = vmatpush1.msra.mxu0 0.0
    %259 = vmatprep.subr.mxu0 0.0
    %260 = vmatpush1.msra.mxu0 0.0
    %261 = vmatprep.subr.mxu0 0.0
    %262 = vmatpush1.msra.mxu0 0.0
    %263 = vmatprep.subr.mxu0 0.0
    %264 = vmatpush1.msra.mxu0 0.0
    %265 = vmatprep.subr.mxu0 0.0
    %266 = vmatpush1.msra.mxu0 0.0
    %267 = vmatprep.subr.mxu0 0.0
    %268 = vmatpush1.msra.mxu0 0.0
    %269 = vmatprep.subr.mxu0 0.0
    %270 = vmatpush1.msra.mxu0 0.0
    %271 = vmatprep.subr.mxu0 0.0
    %272 = vmatpush1.msra.mxu0 0.0
    %273 = vmatprep.subr.mxu0 0.0
    %274 = vmatpush1.msra.mxu0 0.0
    %275 = vmatprep.subr.mxu0 0.0
    %276 = vmatpush1.msra.mxu0 0.0
    %277 = vmatprep.subr.mxu0 0.0
    %278 = vmatpush1.msra.mxu0 0.0
    %279 = vmatprep.subr.mxu0 0.0
    %280 = vmatpush1.msra.mxu0 0.0
    %281 = vmatprep.mubr.f32.mxu0 0.0
    %282 = vmatmul.mubr.f32.gmra.mrb[0].mxu0 %v212
    %v283 = vpop.f32.mrb[0].mxu0
    %v284 = vadd.f32 0.0, %v283
    %v285 = vpop.f32.mrb[0].mxu0
    %286 = vmatprep.mubr.f32.mxu0 0.0
    %287 = vmatmul.mubr.f32.gmra.mrb[0].mxu0 %v215
    %v288 = vpop.f32.mrb[0].mxu0
    %v289 = vadd.f32 0.0, %v288
    %v290 = vpop.f32.mrb[0].mxu0
    %291 = vdwg.mxu0
    %v293 = vsel %vm210, %v200, 0
    %v296 = vsel %vm210, %v205, 0
    %298 = vmatprep.subr.mxu0 0.0
    %299 = vmatpush1.msra.mxu0 %v208
    %300 = vmatprep.subr.mxu0 0.0
    %301 = vmatpush1.msra.mxu0 0.0
    %302 = vmatprep.subr.mxu0 0.0
    %303 = vmatpush1.msra.mxu0 0.0
    %304 = vmatprep.subr.mxu0 0.0
    %305 = vmatpush1.msra.mxu0 0.0
    %306 = vmatprep.subr.mxu0 0.0
    %307 = vmatpush1.msra.mxu0 0.0
    %308 = vmatprep.subr.mxu0 0.0
    %309 = vmatpush1.msra.mxu0 0.0
    %310 = vmatprep.subr.mxu0 0.0
    %311 = vmatpush1.msra.mxu0 0.0
    %312 = vmatprep.subr.mxu0 0.0
    %313 = vmatpush1.msra.mxu0 0.0
    %314 = vmatprep.subr.mxu0 0.0
    %315 = vmatpush1.msra.mxu0 0.0
    %316 = vmatprep.subr.mxu0 0.0
    %317 = vmatpush1.msra.mxu0 0.0
    %318 = vmatprep.subr.mxu0 0.0
    %319 = vmatpush1.msra.mxu0 0.0
    %320 = vmatprep.subr.mxu0 0.0
    %321 = vmatpush1.msra.mxu0 0.0
    %322 = vmatprep.subr.mxu0 0.0
    %323 = vmatpush1.msra.mxu0 0.0
    %324 = vmatprep.subr.mxu0 0.0
    %325 = vmatpush1.msra.mxu0 0.0
    %326 = vmatprep.subr.mxu0 0.0
    %327 = vmatpush1.msra.mxu0 0.0
    %328 = vmatprep.subr.mxu0 0.0
    %329 = vmatpush1.msra.mxu0 0.0
    %330 = vmatprep.subr.mxu0 0.0
    %331 = vmatpush1.msra.mxu0 0.0
    %332 = vmatprep.subr.mxu0 0.0
    %333 = vmatpush1.msra.mxu0 0.0
    %334 = vmatprep.subr.mxu0 0.0
    %335 = vmatpush1.msra.mxu0 0.0
    %336 = vmatprep.subr.mxu0 0.0
    %337 = vmatpush1.msra.mxu0 0.0
    %338 = vmatprep.subr.mxu0 0.0
    %339 = vmatpush1.msra.mxu0 0.0
    %340 = vmatprep.subr.mxu0 0.0
    %341 = vmatpush1.msra.mxu0 0.0
    %342 = vmatprep.subr.mxu0 0.0
    %343 = vmatpush1.msra.mxu0 0.0
    %344 = vmatprep.subr.mxu0 0.0
    %345 = vmatpush1.msra.mxu0 0.0
    %346 = vmatprep.subr.mxu0 0.0
    %347 = vmatpush1.msra.mxu0 0.0
    %348 = vmatprep.subr.mxu0 0.0
    %349 = vmatpush1.msra.mxu0 0.0
    %350 = vmatprep.subr.mxu0 0.0
    %351 = vmatpush1.msra.mxu0 0.0
    %352 = vmatprep.subr.mxu0 0.0
    %353 = vmatpush1.msra.mxu0 0.0
    %354 = vmatprep.subr.mxu0 0.0
    %355 = vmatpush1.msra.mxu0 0.0
    %356 = vmatprep.subr.mxu0 0.0
    %357 = vmatpush1.msra.mxu0 0.0
    %358 = vmatprep.subr.mxu0 0.0
    %359 = vmatpush1.msra.mxu0 0.0
    %360 = vmatprep.subr.mxu0 0.0
    %361 = vmatpush1.msra.mxu0 0.0
    %362 = vmatprep.mubr.f32.mxu0 0.0
    %363 = vmatmul.mubr.f32.gmra.mrb[0].mxu0 %v293
    %v364 = vpop.f32.mrb[0].mxu0
    %v365 = vadd.f32 %v284, %v364
    %v366 = vpop.f32.mrb[0].mxu0
    %367 = vmatprep.mubr.f32.mxu0 0.0
    %368 = vmatmul.mubr.f32.gmra.mrb[0].mxu0 %v296
    %v369 = vpop.f32.mrb[0].mxu0
    %v370 = vadd.f32 %v289, %v369
    %v371 = vpop.f32.mrb[0].mxu0
    %372 = vdwg.mxu0
    %v373 = vld [vmem:[%s4] sm:$0x1]
    %v375 = vlaneseq
    %v376 = vshrl.u32 %v375, 7
    %v377 = vsub.s32 0, %v376
    %v378 = vrot.slane %v373, %v377
    %v380 = vadd.f32 %v365, %v378
    %v381 = vadd.f32 %v370, %v378
    %v382 = vmax.f32 %v380, 0.0
    %v383 = vmax.f32 %v381, 0.0
    %384 = vmatprep.subr.mxu0 0.0
    %385 = vmatpush1.msra.mxu0 %v382
    %386 = vmatprep.subr.mxu0 0.0
    %387 = vmatpush1.msra.mxu0 %v383
    %388 = vmatprep.subr.mxu0 0.0
    %389 = vmatpush1.msra.mxu0 0.0
    %390 = vmatprep.subr.mxu0 0.0
    %391 = vmatpush1.msra.mxu0 0.0
    %392 = vmatprep.subr.mxu0 0.0
    %393 = vmatpush1.msra.mxu0 0.0
    %394 = vmatprep.subr.mxu0 0.0
    %395 = vmatpush1.msra.mxu0 0.0
    %396 = vmatprep.subr.mxu0 0.0
    %397 = vmatpush1.msra.mxu0 0.0
    %398 = vmatprep.subr.mxu0 0.0
    %399 = vmatpush1.msra.mxu0 0.0
    %400 = vmatprep.subr.mxu0 0.0
    %401 = vmatpush1.msra.mxu0 0.0
    %402 = vmatprep.subr.mxu0 0.0
    %403 = vmatpush1.msra.mxu0 0.0
    %404 = vmatprep.subr.mxu0 0.0
    %405 = vmatpush1.msra.mxu0 0.0
    %406 = vmatprep.subr.mxu0 0.0
    %407 = vmatpush1.msra.mxu0 0.0
    %408 = vmatprep.subr.mxu0 0.0
    %409 = vmatpush1.msra.mxu0 0.0
    %410 = vmatprep.subr.mxu0 0.0
    %411 = vmatpush1.msra.mxu0 0.0
    %412 = vmatprep.subr.mxu0 0.0
    %413 = vmatpush1.msra.mxu0 0.0
    %414 = vmatprep.subr.mxu0 0.0
    %415 = vmatpush1.msra.mxu0 0.0
    %416 = vmatprep.subr.mxu0 0.0
    %417 = vmatpush1.msra.mxu0 0.0
    %418 = vmatprep.subr.mxu0 0.0
    %419 = vmatpush1.msra.mxu0 0.0
    %420 = vmatprep.subr.mxu0 0.0
    %421 = vmatpush1.msra.mxu0 0.0
    %422 = vmatprep.subr.mxu0 0.0
    %423 = vmatpush1.msra.mxu0 0.0
    %424 = vmatprep.subr.mxu0 0.0
    %425 = vmatpush1.msra.mxu0 0.0
    %426 = vmatprep.subr.mxu0 0.0
    %427 = vmatpush1.msra.mxu0 0.0
    %428 = vmatprep.subr.mxu0 0.0
    %429 = vmatpush1.msra.mxu0 0.0
    %430 = vmatprep.subr.mxu0 0.0
    %431 = vmatpush1.msra.mxu0 0.0
    %432 = vmatprep.subr.mxu0 0.0
    %433 = vmatpush1.msra.mxu0 0.0
    %434 = vmatprep.subr.mxu0 0.0
    %435 = vmatpush1.msra.mxu0 0.0
    %436 = vmatprep.subr.mxu0 0.0
    %437 = vmatpush1.msra.mxu0 0.0
    %438 = vmatprep.subr.mxu0 0.0
    %439 = vmatpush1.msra.mxu0 0.0
    %440 = vmatprep.subr.mxu0 0.0
    %441 = vmatpush1.msra.mxu0 0.0
    %442 = vmatprep.subr.mxu0 0.0
    %443 = vmatpush1.msra.mxu0 0.0
    %444 = vmatprep.subr.mxu0 0.0
    %445 = vmatpush1.msra.mxu0 0.0
    %446 = vmatprep.subr.mxu0 0.0
    %447 = vmatpush1.msra.mxu0 0.0
    %448 = vmatprep.mubr.f32.mxu0 0.0
    %449 = vmatmul.mubr.f32.gmra.mrb[0].mxu0 %v128
    %v450 = vpop.f32.mrb[0].mxu0
    %v451 = vadd.f32 0.0, %v450
    %v452 = vpop.f32.mrb[0].mxu0
    %453 = vmatprep.mubr.f32.mxu0 0.0
    %454 = vmatmul.mubr.f32.gmra.mrb[0].mxu0 %v131
    %v455 = vpop.f32.mrb[0].mxu0
    %v456 = vadd.f32 0.0, %v455
    %v457 = vpop.f32.mrb[0].mxu0
    %458 = vdwg.mxu0
    %v459 = vld [vmem:[#allocation7] sm:$0xff]
    %v460 = vld [vmem:[#allocation8] sm:$0xff]
    %v462 = vsel %vm210, %v382, 0
    %v465 = vsel %vm210, %v383, 0
    %467 = vmatprep.subr.mxu0 0.0
    %468 = vmatpush1.msra.mxu0 %v460
    %469 = vmatprep.subr.mxu0 0.0
    %470 = vmatpush1.msra.mxu0 0.0
    %471 = vmatprep.subr.mxu0 0.0
    %472 = vmatpush1.msra.mxu0 0.0
    %473 = vmatprep.subr.mxu0 0.0
    %474 = vmatpush1.msra.mxu0 0.0
    %475 = vmatprep.subr.mxu0 0.0
    %476 = vmatpush1.msra.mxu0 0.0
    %477 = vmatprep.subr.mxu0 0.0
    %478 = vmatpush1.msra.mxu0 0.0
    %479 = vmatprep.subr.mxu0 0.0
    %480 = vmatpush1.msra.mxu0 0.0
    %481 = vmatprep.subr.mxu0 0.0
    %482 = vmatpush1.msra.mxu0 0.0
    %483 = vmatprep.subr.mxu0 0.0
    %484 = vmatpush1.msra.mxu0 0.0
    %485 = vmatprep.subr.mxu0 0.0
    %486 = vmatpush1.msra.mxu0 0.0
    %487 = vmatprep.subr.mxu0 0.0
    %488 = vmatpush1.msra.mxu0 0.0
    %489 = vmatprep.subr.mxu0 0.0
    %490 = vmatpush1.msra.mxu0 0.0
    %491 = vmatprep.subr.mxu0 0.0
    %492 = vmatpush1.msra.mxu0 0.0
    %493 = vmatprep.subr.mxu0 0.0
    %494 = vmatpush1.msra.mxu0 0.0
    %495 = vmatprep.subr.mxu0 0.0
    %496 = vmatpush1.msra.mxu0 0.0
    %497 = vmatprep.subr.mxu0 0.0
    %498 = vmatpush1.msra.mxu0 0.0
    %499 = vmatprep.subr.mxu0 0.0
    %500 = vmatpush1.msra.mxu0 0.0
    %501 = vmatprep.subr.mxu0 0.0
    %502 = vmatpush1.msra.mxu0 0.0
    %503 = vmatprep.subr.mxu0 0.0
    %504 = vmatpush1.msra.mxu0 0.0
    %505 = vmatprep.subr.mxu0 0.0
    %506 = vmatpush1.msra.mxu0 0.0
    %507 = vmatprep.subr.mxu0 0.0
    %508 = vmatpush1.msra.mxu0 0.0
    %509 = vmatprep.subr.mxu0 0.0
    %510 = vmatpush1.msra.mxu0 0.0
    %511 = vmatprep.subr.mxu0 0.0
    %512 = vmatpush1.msra.mxu0 0.0
    %513 = vmatprep.subr.mxu0 0.0
    %514 = vmatpush1.msra.mxu0 0.0
    %515 = vmatprep.subr.mxu0 0.0
    %516 = vmatpush1.msra.mxu0 0.0
    %517 = vmatprep.subr.mxu0 0.0
    %518 = vmatpush1.msra.mxu0 0.0
    %519 = vmatprep.subr.mxu0 0.0
    %520 = vmatpush1.msra.mxu0 0.0
    %521 = vmatprep.subr.mxu0 0.0
    %522 = vmatpush1.msra.mxu0 0.0
    %523 = vmatprep.subr.mxu0 0.0
    %524 = vmatpush1.msra.mxu0 0.0
    %525 = vmatprep.subr.mxu0 0.0
    %526 = vmatpush1.msra.mxu0 0.0
    %527 = vmatprep.subr.mxu0 0.0
    %528 = vmatpush1.msra.mxu0 0.0
    %529 = vmatprep.subr.mxu0 0.0
    %530 = vmatpush1.msra.mxu0 0.0
    %531 = vmatprep.mubr.f32.mxu0 0.0
    %532 = vmatmul.mubr.f32.gmra.mrb[0].mxu0 %v462
    %v533 = vpop.f32.mrb[0].mxu0
    %v534 = vadd.f32 0.0, %v533
    %v535 = vpop.f32.mrb[0].mxu0
    %536 = vmatprep.mubr.f32.mxu0 0.0
    %537 = vmatmul.mubr.f32.gmra.mrb[0].mxu0 %v465
    %v538 = vpop.f32.mrb[0].mxu0
    %v539 = vadd.f32 0.0, %v538
    %v540 = vpop.f32.mrb[0].mxu0
    %541 = vdwg.mxu0
    %v543 = vsel %vm210, %v451, 0
    %v546 = vsel %vm210, %v456, 0
    %548 = vmatprep.subr.mxu0 0.0
    %549 = vmatpush1.msra.mxu0 %v459
    %550 = vmatprep.subr.mxu0 0.0
    %551 = vmatpush1.msra.mxu0 0.0
    %552 = vmatprep.subr.mxu0 0.0
    %553 = vmatpush1.msra.mxu0 0.0
    %554 = vmatprep.subr.mxu0 0.0
    %555 = vmatpush1.msra.mxu0 0.0
    %556 = vmatprep.subr.mxu0 0.0
    %557 = vmatpush1.msra.mxu0 0.0
    %558 = vmatprep.subr.mxu0 0.0
    %559 = vmatpush1.msra.mxu0 0.0
    %560 = vmatprep.subr.mxu0 0.0
    %561 = vmatpush1.msra.mxu0 0.0
    %562 = vmatprep.subr.mxu0 0.0
    %563 = vmatpush1.msra.mxu0 0.0
    %564 = vmatprep.subr.mxu0 0.0
    %565 = vmatpush1.msra.mxu0 0.0
    %566 = vmatprep.subr.mxu0 0.0
    %567 = vmatpush1.msra.mxu0 0.0
    %568 = vmatprep.subr.mxu0 0.0
    %569 = vmatpush1.msra.mxu0 0.0
    %570 = vmatprep.subr.mxu0 0.0
    %571 = vmatpush1.msra.mxu0 0.0
    %572 = vmatprep.subr.mxu0 0.0
    %573 = vmatpush1.msra.mxu0 0.0
    %574 = vmatprep.subr.mxu0 0.0
    %575 = vmatpush1.msra.mxu0 0.0
    %576 = vmatprep.subr.mxu0 0.0
    %577 = vmatpush1.msra.mxu0 0.0
    %578 = vmatprep.subr.mxu0 0.0
    %579 = vmatpush1.msra.mxu0 0.0
    %580 = vmatprep.subr.mxu0 0.0
    %581 = vmatpush1.msra.mxu0 0.0
    %582 = vmatprep.subr.mxu0 0.0
    %583 = vmatpush1.msra.mxu0 0.0
    %584 = vmatprep.subr.mxu0 0.0
    %585 = vmatpush1.msra.mxu0 0.0
    %586 = vmatprep.subr.mxu0 0.0
    %587 = vmatpush1.msra.mxu0 0.0
    %588 = vmatprep.subr.mxu0 0.0
    %589 = vmatpush1.msra.mxu0 0.0
    %590 = vmatprep.subr.mxu0 0.0
    %591 = vmatpush1.msra.mxu0 0.0
    %592 = vmatprep.subr.mxu0 0.0
    %593 = vmatpush1.msra.mxu0 0.0
    %594 = vmatprep.subr.mxu0 0.0
    %595 = vmatpush1.msra.mxu0 0.0
    %596 = vmatprep.subr.mxu0 0.0
    %597 = vmatpush1.msra.mxu0 0.0
    %598 = vmatprep.subr.mxu0 0.0
    %599 = vmatpush1.msra.mxu0 0.0
    %600 = vmatprep.subr.mxu0 0.0
    %601 = vmatpush1.msra.mxu0 0.0
    %602 = vmatprep.subr.mxu0 0.0
    %603 = vmatpush1.msra.mxu0 0.0
    %604 = vmatprep.subr.mxu0 0.0
    %605 = vmatpush1.msra.mxu0 0.0
    %606 = vmatprep.subr.mxu0 0.0
    %607 = vmatpush1.msra.mxu0 0.0
    %608 = vmatprep.subr.mxu0 0.0
    %609 = vmatpush1.msra.mxu0 0.0
    %610 = vmatprep.subr.mxu0 0.0
    %611 = vmatpush1.msra.mxu0 0.0
    %612 = vmatprep.mubr.f32.mxu0 0.0
    %613 = vmatmul.mubr.f32.gmra.mrb[0].mxu0 %v543
    %v614 = vpop.f32.mrb[0].mxu0
    %v615 = vadd.f32 %v534, %v614
    %v616 = vpop.f32.mrb[0].mxu0
    %617 = vmatprep.mubr.f32.mxu0 0.0
    %618 = vmatmul.mubr.f32.gmra.mrb[0].mxu0 %v546
    %v619 = vpop.f32.mrb[0].mxu0
    %v620 = vadd.f32 %v539, %v619
    %v621 = vpop.f32.mrb[0].mxu0
    %622 = vdwg.mxu0
    %v623 = vld [vmem:[%s7] sm:$0x1]
    %v625 = vlaneseq
    %v626 = vshrl.u32 %v625, 7
    %v627 = vsub.s32 0, %v626
    %v628 = vrot.slane %v623, %v627
    %v630 = vadd.f32 %v615, %v628
    %v631 = vadd.f32 %v620, %v628
    %v632 = vmax.f32 %v630, 0.0
    %v633 = vmax.f32 %v631, 0.0
    %634 = vmatprep.subr.mxu0 0.0
    %635 = vmatpush1.msra.mxu0 %v632
    %636 = vmatprep.subr.mxu0 0.0
    %637 = vmatpush1.msra.mxu0 %v633
    %638 = vmatprep.subr.mxu0 0.0
    %639 = vmatpush1.msra.mxu0 0.0
    %640 = vmatprep.subr.mxu0 0.0
    %641 = vmatpush1.msra.mxu0 0.0
    %642 = vmatprep.subr.mxu0 0.0
    %643 = vmatpush1.msra.mxu0 0.0
    %644 = vmatprep.subr.mxu0 0.0
    %645 = vmatpush1.msra.mxu0 0.0
    %646 = vmatprep.subr.mxu0 0.0
    %647 = vmatpush1.msra.mxu0 0.0
    %648 = vmatprep.subr.mxu0 0.0
    %649 = vmatpush1.msra.mxu0 0.0
    %650 = vmatprep.subr.mxu0 0.0
    %651 = vmatpush1.msra.mxu0 0.0
    %652 = vmatprep.subr.mxu0 0.0
    %653 = vmatpush1.msra.mxu0 0.0
    %654 = vmatprep.subr.mxu0 0.0
    %655 = vmatpush1.msra.mxu0 0.0
    %656 = vmatprep.subr.mxu0 0.0
    %657 = vmatpush1.msra.mxu0 0.0
    %658 = vmatprep.subr.mxu0 0.0
    %659 = vmatpush1.msra.mxu0 0.0
    %660 = vmatprep.subr.mxu0 0.0
    %661 = vmatpush1.msra.mxu0 0.0
    %662 = vmatprep.subr.mxu0 0.0
    %663 = vmatpush1.msra.mxu0 0.0
    %664 = vmatprep.subr.mxu0 0.0
    %665 = vmatpush1.msra.mxu0 0.0
    %666 = vmatprep.subr.mxu0 0.0
    %667 = vmatpush1.msra.mxu0 0.0
    %668 = vmatprep.subr.mxu0 0.0
    %669 = vmatpush1.msra.mxu0 0.0
    %670 = vmatprep.subr.mxu0 0.0
    %671 = vmatpush1.msra.mxu0 0.0
    %672 = vmatprep.subr.mxu0 0.0
    %673 = vmatpush1.msra.mxu0 0.0
    %674 = vmatprep.subr.mxu0 0.0
    %675 = vmatpush1.msra.mxu0 0.0
    %676 = vmatprep.subr.mxu0 0.0
    %677 = vmatpush1.msra.mxu0 0.0
    %678 = vmatprep.subr.mxu0 0.0
    %679 = vmatpush1.msra.mxu0 0.0
    %680 = vmatprep.subr.mxu0 0.0
    %681 = vmatpush1.msra.mxu0 0.0
    %682 = vmatprep.subr.mxu0 0.0
    %683 = vmatpush1.msra.mxu0 0.0
    %684 = vmatprep.subr.mxu0 0.0
    %685 = vmatpush1.msra.mxu0 0.0
    %686 = vmatprep.subr.mxu0 0.0
    %687 = vmatpush1.msra.mxu0 0.0
    %688 = vmatprep.subr.mxu0 0.0
    %689 = vmatpush1.msra.mxu0 0.0
    %690 = vmatprep.subr.mxu0 0.0
    %691 = vmatpush1.msra.mxu0 0.0
    %692 = vmatprep.subr.mxu0 0.0
    %693 = vmatpush1.msra.mxu0 0.0
    %694 = vmatprep.subr.mxu0 0.0
    %695 = vmatpush1.msra.mxu0 0.0
    %696 = vmatprep.subr.mxu0 0.0
    %697 = vmatpush1.msra.mxu0 0.0
    %698 = vmatprep.mubr.f32.mxu0 0.0
    %699 = vmatmul.mubr.f32.gmra.mrb[0].mxu0 %v128
    %v700 = vpop.f32.mrb[0].mxu0
    %v701 = vadd.f32 0.0, %v700
    %v702 = vpop.f32.mrb[0].mxu0
    %703 = vmatprep.mubr.f32.mxu0 0.0
    %704 = vmatmul.mubr.f32.gmra.mrb[0].mxu0 %v131
    %v705 = vpop.f32.mrb[0].mxu0
    %v706 = vadd.f32 0.0, %v705
    %v707 = vpop.f32.mrb[0].mxu0
    %708 = vdwg.mxu0
    %v709 = vld [vmem:[%s8] sm:$0xff]
    %v710 = vld [vmem:[#allocation10] sm:$0xff]
    %v712 = vsel %vm210, %v632, 0
    %v715 = vsel %vm210, %v633, 0
    %717 = vmatprep.subr.mxu0 0.0
    %718 = vmatpush1.msra.mxu0 %v710
    %719 = vmatprep.subr.mxu0 0.0
    %720 = vmatpush1.msra.mxu0 0.0
    %721 = vmatprep.subr.mxu0 0.0
    %722 = vmatpush1.msra.mxu0 0.0
    %723 = vmatprep.subr.mxu0 0.0
    %724 = vmatpush1.msra.mxu0 0.0
    %725 = vmatprep.subr.mxu0 0.0
    %726 = vmatpush1.msra.mxu0 0.0
    %727 = vmatprep.subr.mxu0 0.0
    %728 = vmatpush1.msra.mxu0 0.0
    %729 = vmatprep.subr.mxu0 0.0
    %730 = vmatpush1.msra.mxu0 0.0
    %731 = vmatprep.subr.mxu0 0.0
    %732 = vmatpush1.msra.mxu0 0.0
    %733 = vmatprep.subr.mxu0 0.0
    %734 = vmatpush1.msra.mxu0 0.0
    %735 = vmatprep.subr.mxu0 0.0
    %736 = vmatpush1.msra.mxu0 0.0
    %737 = vmatprep.subr.mxu0 0.0
    %738 = vmatpush1.msra.mxu0 0.0
    %739 = vmatprep.subr.mxu0 0.0
    %740 = vmatpush1.msra.mxu0 0.0
    %741 = vmatprep.subr.mxu0 0.0
    %742 = vmatpush1.msra.mxu0 0.0
    %743 = vmatprep.subr.mxu0 0.0
    %744 = vmatpush1.msra.mxu0 0.0
    %745 = vmatprep.subr.mxu0 0.0
    %746 = vmatpush1.msra.mxu0 0.0
    %747 = vmatprep.subr.mxu0 0.0
    %748 = vmatpush1.msra.mxu0 0.0
    %749 = vmatprep.subr.mxu0 0.0
    %750 = vmatpush1.msra.mxu0 0.0
    %751 = vmatprep.subr.mxu0 0.0
    %752 = vmatpush1.msra.mxu0 0.0
    %753 = vmatprep.subr.mxu0 0.0
    %754 = vmatpush1.msra.mxu0 0.0
    %755 = vmatprep.subr.mxu0 0.0
    %756 = vmatpush1.msra.mxu0 0.0
    %757 = vmatprep.subr.mxu0 0.0
    %758 = vmatpush1.msra.mxu0 0.0
    %759 = vmatprep.subr.mxu0 0.0
    %760 = vmatpush1.msra.mxu0 0.0
    %761 = vmatprep.subr.mxu0 0.0
    %762 = vmatpush1.msra.mxu0 0.0
    %763 = vmatprep.subr.mxu0 0.0
    %764 = vmatpush1.msra.mxu0 0.0
    %765 = vmatprep.subr.mxu0 0.0
    %766 = vmatpush1.msra.mxu0 0.0
    %767 = vmatprep.subr.mxu0 0.0
    %768 = vmatpush1.msra.mxu0 0.0
    %769 = vmatprep.subr.mxu0 0.0
    %770 = vmatpush1.msra.mxu0 0.0
    %771 = vmatprep.subr.mxu0 0.0
    %772 = vmatpush1.msra.mxu0 0.0
    %773 = vmatprep.subr.mxu0 0.0
    %774 = vmatpush1.msra.mxu0 0.0
    %775 = vmatprep.subr.mxu0 0.0
    %776 = vmatpush1.msra.mxu0 0.0
    %777 = vmatprep.subr.mxu0 0.0
    %778 = vmatpush1.msra.mxu0 0.0
    %779 = vmatprep.subr.mxu0 0.0
    %780 = vmatpush1.msra.mxu0 0.0
    %781 = vmatprep.mubr.f32.mxu0 0.0
    %782 = vmatmul.mubr.f32.gmra.mrb[0].mxu0 %v712
    %v783 = vpop.f32.mrb[0].mxu0
    %v784 = vadd.f32 0.0, %v783
    %v785 = vpop.f32.mrb[0].mxu0
    %786 = vmatprep.mubr.f32.mxu0 0.0
    %787 = vmatmul.mubr.f32.gmra.mrb[0].mxu0 %v715
    %v788 = vpop.f32.mrb[0].mxu0
    %v789 = vadd.f32 0.0, %v788
    %v790 = vpop.f32.mrb[0].mxu0
    %791 = vdwg.mxu0
    %v793 = vsel %vm210, %v701, 0
    %v796 = vsel %vm210, %v706, 0
    %798 = vmatprep.subr.mxu0 0.0
    %799 = vmatpush1.msra.mxu0 %v709
    %800 = vmatprep.subr.mxu0 0.0
    %801 = vmatpush1.msra.mxu0 0.0
    %802 = vmatprep.subr.mxu0 0.0
    %803 = vmatpush1.msra.mxu0 0.0
    %804 = vmatprep.subr.mxu0 0.0
    %805 = vmatpush1.msra.mxu0 0.0
    %806 = vmatprep.subr.mxu0 0.0
    %807 = vmatpush1.msra.mxu0 0.0
    %808 = vmatprep.subr.mxu0 0.0
    %809 = vmatpush1.msra.mxu0 0.0
    %810 = vmatprep.subr.mxu0 0.0
    %811 = vmatpush1.msra.mxu0 0.0
    %812 = vmatprep.subr.mxu0 0.0
    %813 = vmatpush1.msra.mxu0 0.0
    %814 = vmatprep.subr.mxu0 0.0
    %815 = vmatpush1.msra.mxu0 0.0
    %816 = vmatprep.subr.mxu0 0.0
    %817 = vmatpush1.msra.mxu0 0.0
    %818 = vmatprep.subr.mxu0 0.0
    %819 = vmatpush1.msra.mxu0 0.0
    %820 = vmatprep.subr.mxu0 0.0
    %821 = vmatpush1.msra.mxu0 0.0
    %822 = vmatprep.subr.mxu0 0.0
    %823 = vmatpush1.msra.mxu0 0.0
    %824 = vmatprep.subr.mxu0 0.0
    %825 = vmatpush1.msra.mxu0 0.0
    %826 = vmatprep.subr.mxu0 0.0
    %827 = vmatpush1.msra.mxu0 0.0
    %828 = vmatprep.subr.mxu0 0.0
    %829 = vmatpush1.msra.mxu0 0.0
    %830 = vmatprep.subr.mxu0 0.0
    %831 = vmatpush1.msra.mxu0 0.0
    %832 = vmatprep.subr.mxu0 0.0
    %833 = vmatpush1.msra.mxu0 0.0
    %834 = vmatprep.subr.mxu0 0.0
    %835 = vmatpush1.msra.mxu0 0.0
    %836 = vmatprep.subr.mxu0 0.0
    %837 = vmatpush1.msra.mxu0 0.0
    %838 = vmatprep.subr.mxu0 0.0
    %839 = vmatpush1.msra.mxu0 0.0
    %840 = vmatprep.subr.mxu0 0.0
    %841 = vmatpush1.msra.mxu0 0.0
    %842 = vmatprep.subr.mxu0 0.0
    %843 = vmatpush1.msra.mxu0 0.0
    %844 = vmatprep.subr.mxu0 0.0
    %845 = vmatpush1.msra.mxu0 0.0
    %846 = vmatprep.subr.mxu0 0.0
    %847 = vmatpush1.msra.mxu0 0.0
    %848 = vmatprep.subr.mxu0 0.0
    %849 = vmatpush1.msra.mxu0 0.0
    %850 = vmatprep.subr.mxu0 0.0
    %851 = vmatpush1.msra.mxu0 0.0
    %852 = vmatprep.subr.mxu0 0.0
    %853 = vmatpush1.msra.mxu0 0.0
    %854 = vmatprep.subr.mxu0 0.0
    %855 = vmatpush1.msra.mxu0 0.0
    %856 = vmatprep.subr.mxu0 0.0
    %857 = vmatpush1.msra.mxu0 0.0
    %858 = vmatprep.subr.mxu0 0.0
    %859 = vmatpush1.msra.mxu0 0.0
    %860 = vmatprep.subr.mxu0 0.0
    %861 = vmatpush1.msra.mxu0 0.0
    %862 = vmatprep.mubr.f32.mxu0 0.0
    %863 = vmatmul.mubr.f32.gmra.mrb[0].mxu0 %v793
    %v864 = vpop.f32.mrb[0].mxu0
    %v865 = vadd.f32 %v784, %v864
    %v866 = vpop.f32.mrb[0].mxu0
    %867 = vmatprep.mubr.f32.mxu0 0.0
    %868 = vmatmul.mubr.f32.gmra.mrb[0].mxu0 %v796
    %v869 = vpop.f32.mrb[0].mxu0
    %v870 = vadd.f32 %v789, %v869
    %v871 = vpop.f32.mrb[0].mxu0
    %872 = vdwg.mxu0
    %v873 = vld [vmem:[%s10] sm:$0x1]
    %v875 = vlaneseq
    %v876 = vshrl.u32 %v875, 7
    %v877 = vsub.s32 0, %v876
    %v878 = vrot.slane %v873, %v877
    %v880 = vadd.f32 %v865, %v878
    %v881 = vadd.f32 %v870, %v878
    %v882 = vmax.f32 %v880, 0.0
    %v883 = vmax.f32 %v881, 0.0
    %884 = vmatprep.subr.mxu0 0.0
    %885 = vmatpush1.msra.mxu0 %v882
    %886 = vmatprep.subr.mxu0 0.0
    %887 = vmatpush1.msra.mxu0 %v883
    %888 = vmatprep.subr.mxu0 0.0
    %889 = vmatpush1.msra.mxu0 0.0
    %890 = vmatprep.subr.mxu0 0.0
    %891 = vmatpush1.msra.mxu0 0.0
    %892 = vmatprep.subr.mxu0 0.0
    %893 = vmatpush1.msra.mxu0 0.0
    %894 = vmatprep.subr.mxu0 0.0
    %895 = vmatpush1.msra.mxu0 0.0
    %896 = vmatprep.subr.mxu0 0.0
    %897 = vmatpush1.msra.mxu0 0.0
    %898 = vmatprep.subr.mxu0 0.0
    %899 = vmatpush1.msra.mxu0 0.0
    %900 = vmatprep.subr.mxu0 0.0
    %901 = vmatpush1.msra.mxu0 0.0
    %902 = vmatprep.subr.mxu0 0.0
    %903 = vmatpush1.msra.mxu0 0.0
    %904 = vmatprep.subr.mxu0 0.0
    %905 = vmatpush1.msra.mxu0 0.0
    %906 = vmatprep.subr.mxu0 0.0
    %907 = vmatpush1.msra.mxu0 0.0
    %908 = vmatprep.subr.mxu0 0.0
    %909 = vmatpush1.msra.mxu0 0.0
    %910 = vmatprep.subr.mxu0 0.0
    %911 = vmatpush1.msra.mxu0 0.0
    %912 = vmatprep.subr.mxu0 0.0
    %913 = vmatpush1.msra.mxu0 0.0
    %914 = vmatprep.subr.mxu0 0.0
    %915 = vmatpush1.msra.mxu0 0.0
    %916 = vmatprep.subr.mxu0 0.0
    %917 = vmatpush1.msra.mxu0 0.0
    %918 = vmatprep.subr.mxu0 0.0
    %919 = vmatpush1.msra.mxu0 0.0
    %920 = vmatprep.subr.mxu0 0.0
    %921 = vmatpush1.msra.mxu0 0.0
    %922 = vmatprep.subr.mxu0 0.0
    %923 = vmatpush1.msra.mxu0 0.0
    %924 = vmatprep.subr.mxu0 0.0
    %925 = vmatpush1.msra.mxu0 0.0
    %926 = vmatprep.subr.mxu0 0.0
    %927 = vmatpush1.msra.mxu0 0.0
    %928 = vmatprep.subr.mxu0 0.0
    %929 = vmatpush1.msra.mxu0 0.0
    %930 = vmatprep.subr.mxu0 0.0
    %931 = vmatpush1.msra.mxu0 0.0
    %932 = vmatprep.subr.mxu0 0.0
    %933 = vmatpush1.msra.mxu0 0.0
    %934 = vmatprep.subr.mxu0 0.0
    %935 = vmatpush1.msra.mxu0 0.0
    %936 = vmatprep.subr.mxu0 0.0
    %937 = vmatpush1.msra.mxu0 0.0
    %938 = vmatprep.subr.mxu0 0.0
    %939 = vmatpush1.msra.mxu0 0.0
    %940 = vmatprep.subr.mxu0 0.0
    %941 = vmatpush1.msra.mxu0 0.0
    %942 = vmatprep.subr.mxu0 0.0
    %943 = vmatpush1.msra.mxu0 0.0
    %944 = vmatprep.subr.mxu0 0.0
    %945 = vmatpush1.msra.mxu0 0.0
    %946 = vmatprep.subr.mxu0 0.0
    %947 = vmatpush1.msra.mxu0 0.0
    %948 = vmatprep.mubr.f32.mxu0 0.0
    %949 = vmatmul.mubr.f32.gmra.mrb[0].mxu0 %v128
    %v950 = vpop.f32.mrb[0].mxu0
    %v951 = vadd.f32 0.0, %v950
    %v952 = vpop.f32.mrb[0].mxu0
    %953 = vmatprep.mubr.f32.mxu0 0.0
    %954 = vmatmul.mubr.f32.gmra.mrb[0].mxu0 %v131
    %v955 = vpop.f32.mrb[0].mxu0
    %v956 = vadd.f32 0.0, %v955
    %v957 = vpop.f32.mrb[0].mxu0
    %958 = vdwg.mxu0
    %v959 = vld [vmem:[%s11] sm:$0xff]
    %v960 = vld [vmem:[%s11 + $0x8] sm:$0xff]
    %v961 = vld [vmem:[%s12] sm:$0xff]
    %v962 = vld [vmem:[%s12 + $0x8] sm:$0xff]
    %v964 = vsel %vm126, %v882, 0
    %v967 = vsel %vm126, %v883, 0
    %969 = vmatprep.subr.mxu0 0.0
    %970 = vmatpush1.msra.mxu0 %v961
    %971 = vmatprep.subr.mxu0 0.0
    %972 = vmatpush1.msra.mxu0 %v962
    %973 = vmatprep.subr.mxu0 0.0
    %974 = vmatpush1.msra.mxu0 0.0
    %975 = vmatprep.subr.mxu0 0.0
    %976 = vmatpush1.msra.mxu0 0.0
    %977 = vmatprep.subr.mxu0 0.0
    %978 = vmatpush1.msra.mxu0 0.0
    %979 = vmatprep.subr.mxu0 0.0
    %980 = vmatpush1.msra.mxu0 0.0
    %981 = vmatprep.subr.mxu0 0.0
    %982 = vmatpush1.msra.mxu0 0.0
    %983 = vmatprep.subr.mxu0 0.0
    %984 = vmatpush1.msra.mxu0 0.0
    %985 = vmatprep.subr.mxu0 0.0
    %986 = vmatpush1.msra.mxu0 0.0
    %987 = vmatprep.subr.mxu0 0.0
    %988 = vmatpush1.msra.mxu0 0.0
    %989 = vmatprep.subr.mxu0 0.0
    %990 = vmatpush1.msra.mxu0 0.0
    %991 = vmatprep.subr.mxu0 0.0
    %992 = vmatpush1.msra.mxu0 0.0
    %993 = vmatprep.subr.mxu0 0.0
    %994 = vmatpush1.msra.mxu0 0.0
    %995 = vmatprep.subr.mxu0 0.0
    %996 = vmatpush1.msra.mxu0 0.0
    %997 = vmatprep.subr.mxu0 0.0
    %998 = vmatpush1.msra.mxu0 0.0
    %999 = vmatprep.subr.mxu0 0.0
    %1000 = vmatpush1.msra.mxu0 0.0
    %1001 = vmatprep.subr.mxu0 0.0
    %1002 = vmatpush1.msra.mxu0 0.0
    %1003 = vmatprep.subr.mxu0 0.0
    %1004 = vmatpush1.msra.mxu0 0.0
    %1005 = vmatprep.subr.mxu0 0.0
    %1006 = vmatpush1.msra.mxu0 0.0
    %1007 = vmatprep.subr.mxu0 0.0
    %1008 = vmatpush1.msra.mxu0 0.0
    %1009 = vmatprep.subr.mxu0 0.0
    %1010 = vmatpush1.msra.mxu0 0.0
    %1011 = vmatprep.subr.mxu0 0.0
    %1012 = vmatpush1.msra.mxu0 0.0
    %1013 = vmatprep.subr.mxu0 0.0
    %1014 = vmatpush1.msra.mxu0 0.0
    %1015 = vmatprep.subr.mxu0 0.0
    %1016 = vmatpush1.msra.mxu0 0.0
    %1017 = vmatprep.subr.mxu0 0.0
    %1018 = vmatpush1.msra.mxu0 0.0
    %1019 = vmatprep.subr.mxu0 0.0
    %1020 = vmatpush1.msra.mxu0 0.0
    %1021 = vmatprep.subr.mxu0 0.0
    %1022 = vmatpush1.msra.mxu0 0.0
    %1023 = vmatprep.subr.mxu0 0.0
    %1024 = vmatpush1.msra.mxu0 0.0
    %1025 = vmatprep.subr.mxu0 0.0
    %1026 = vmatpush1.msra.mxu0 0.0
    %1027 = vmatprep.subr.mxu0 0.0
    %1028 = vmatpush1.msra.mxu0 0.0
    %1029 = vmatprep.subr.mxu0 0.0
    %1030 = vmatpush1.msra.mxu0 0.0
    %1031 = vmatprep.subr.mxu0 0.0
    %1032 = vmatpush1.msra.mxu0 0.0
    %1033 = vmatprep.mubr.f32.mxu0 0.0
    %1034 = vmatmul.mubr.f32.gmra.mrb[0].mxu0 %v964
    %v1035 = vpop.f32.mrb[0].mxu0
    %v1036 = vadd.f32 0.0, %v1035
    %v1037 = vpop.f32.mrb[0].mxu0
    %1038 = vmatprep.mubr.f32.mxu0 0.0
    %1039 = vmatmul.mubr.f32.gmra.mrb[0].mxu0 %v967
    %v1040 = vpop.f32.mrb[0].mxu0
    %v1041 = vadd.f32 0.0, %v1040
    %v1042 = vpop.f32.mrb[0].mxu0
    %1043 = vdwg.mxu0
    %v1045 = vsel %vm126, %v951, 0
    %v1048 = vsel %vm126, %v956, 0
    %1050 = vmatprep.subr.mxu0 0.0
    %1051 = vmatpush1.msra.mxu0 %v959
    %1052 = vmatprep.subr.mxu0 0.0
    %1053 = vmatpush1.msra.mxu0 %v960
    %1054 = vmatprep.subr.mxu0 0.0
    %1055 = vmatpush1.msra.mxu0 0.0
    %1056 = vmatprep.subr.mxu0 0.0
    %1057 = vmatpush1.msra.mxu0 0.0
    %1058 = vmatprep.subr.mxu0 0.0
    %1059 = vmatpush1.msra.mxu0 0.0
    %1060 = vmatprep.subr.mxu0 0.0
    %1061 = vmatpush1.msra.mxu0 0.0
    %1062 = vmatprep.subr.mxu0 0.0
    %1063 = vmatpush1.msra.mxu0 0.0
    %1064 = vmatprep.subr.mxu0 0.0
    %1065 = vmatpush1.msra.mxu0 0.0
    %1066 = vmatprep.subr.mxu0 0.0
    %1067 = vmatpush1.msra.mxu0 0.0
    %1068 = vmatprep.subr.mxu0 0.0
    %1069 = vmatpush1.msra.mxu0 0.0
    %1070 = vmatprep.subr.mxu0 0.0
    %1071 = vmatpush1.msra.mxu0 0.0
    %1072 = vmatprep.subr.mxu0 0.0
    %1073 = vmatpush1.msra.mxu0 0.0
    %1074 = vmatprep.subr.mxu0 0.0
    %1075 = vmatpush1.msra.mxu0 0.0
    %1076 = vmatprep.subr.mxu0 0.0
    %1077 = vmatpush1.msra.mxu0 0.0
    %1078 = vmatprep.subr.mxu0 0.0
    %1079 = vmatpush1.msra.mxu0 0.0
    %1080 = vmatprep.subr.mxu0 0.0
    %1081 = vmatpush1.msra.mxu0 0.0
    %1082 = vmatprep.subr.mxu0 0.0
    %1083 = vmatpush1.msra.mxu0 0.0
    %1084 = vmatprep.subr.mxu0 0.0
    %1085 = vmatpush1.msra.mxu0 0.0
    %1086 = vmatprep.subr.mxu0 0.0
    %1087 = vmatpush1.msra.mxu0 0.0
    %1088 = vmatprep.subr.mxu0 0.0
    %1089 = vmatpush1.msra.mxu0 0.0
    %1090 = vmatprep.subr.mxu0 0.0
    %1091 = vmatpush1.msra.mxu0 0.0
    %1092 = vmatprep.subr.mxu0 0.0
    %1093 = vmatpush1.msra.mxu0 0.0
    %1094 = vmatprep.subr.mxu0 0.0
    %1095 = vmatpush1.msra.mxu0 0.0
    %1096 = vmatprep.subr.mxu0 0.0
    %1097 = vmatpush1.msra.mxu0 0.0
    %1098 = vmatprep.subr.mxu0 0.0
    %1099 = vmatpush1.msra.mxu0 0.0
    %1100 = vmatprep.subr.mxu0 0.0
    %1101 = vmatpush1.msra.mxu0 0.0
    %1102 = vmatprep.subr.mxu0 0.0
    %1103 = vmatpush1.msra.mxu0 0.0
    %1104 = vmatprep.subr.mxu0 0.0
    %1105 = vmatpush1.msra.mxu0 0.0
    %1106 = vmatprep.subr.mxu0 0.0
    %1107 = vmatpush1.msra.mxu0 0.0
    %1108 = vmatprep.subr.mxu0 0.0
    %1109 = vmatpush1.msra.mxu0 0.0
    %1110 = vmatprep.subr.mxu0 0.0
    %1111 = vmatpush1.msra.mxu0 0.0
    %1112 = vmatprep.subr.mxu0 0.0
    %1113 = vmatpush1.msra.mxu0 0.0
    %1114 = vmatprep.mubr.f32.mxu0 0.0
    %1115 = vmatmul.mubr.f32.gmra.mrb[0].mxu0 %v1045
    %v1116 = vpop.f32.mrb[0].mxu0
    %v1117 = vadd.f32 %v1036, %v1116
    %v1118 = vpop.f32.mrb[0].mxu0
    %1119 = vmatprep.mubr.f32.mxu0 0.0
    %1120 = vmatmul.mubr.f32.gmra.mrb[0].mxu0 %v1048
    %v1121 = vpop.f32.mrb[0].mxu0
    %v1122 = vadd.f32 %v1041, %v1121
    %v1123 = vpop.f32.mrb[0].mxu0
    %1124 = vdwg.mxu0
    %v1125 = vld [vmem:[%s13] sm:$0x1]
    %v1127 = vlaneseq
    %v1128 = vshrl.u32 %v1127, 7
    %v1129 = vsub.s32 0, %v1128
    %v1130 = vrot.slane %v1125, %v1129
    %v1132 = vadd.f32 %v1117, %v1130
    %v1133 = vadd.f32 %v1122, %v1130
    %v1134 = vmax.f32 %v1132, 0.0
    %v1135 = vmax.f32 %v1133, 0.0
    %v1136 = vld [vmem:[%s14] sm:$0xff]
    %v1137 = vld [vmem:[%s14 + $0x8] sm:$0xff]
    %v1138 = vld [vmem:[%s15] sm:$0x1]
    %v1140 = vlaneseq
    %v1141 = vshrl.u32 %v1140, 7
    %v1142 = vsub.s32 0, %v1141
    %v1143 = vrot.slane %v1138, %v1142
    %v1146 = vsel %vm126, %v1134, 0
    %v1149 = vsel %vm126, %v1135, 0
    %1151 = vmatprep.subr.mxu0 0.0
    %1152 = vmatpush1.msra.mxu0 %v1136
    %1153 = vmatprep.subr.mxu0 0.0
    %1154 = vmatpush1.msra.mxu0 %v1137
    %1155 = vmatprep.subr.mxu0 0.0
    %1156 = vmatpush1.msra.mxu0 0.0
    %1157 = vmatprep.subr.mxu0 0.0
    %1158 = vmatpush1.msra.mxu0 0.0
    %1159 = vmatprep.subr.mxu0 0.0
    %1160 = vmatpush1.msra.mxu0 0.0
    %1161 = vmatprep.subr.mxu0 0.0
    %1162 = vmatpush1.msra.mxu0 0.0
    %1163 = vmatprep.subr.mxu0 0.0
    %1164 = vmatpush1.msra.mxu0 0.0
    %1165 = vmatprep.subr.mxu0 0.0
    %1166 = vmatpush1.msra.mxu0 0.0
    %1167 = vmatprep.subr.mxu0 0.0
    %1168 = vmatpush1.msra.mxu0 0.0
    %1169 = vmatprep.subr.mxu0 0.0
    %1170 = vmatpush1.msra.mxu0 0.0
    %1171 = vmatprep.subr.mxu0 0.0
    %1172 = vmatpush1.msra.mxu0 0.0
    %1173 = vmatprep.subr.mxu0 0.0
    %1174 = vmatpush1.msra.mxu0 0.0
    %1175 = vmatprep.subr.mxu0 0.0
    %1176 = vmatpush1.msra.mxu0 0.0
    %1177 = vmatprep.subr.mxu0 0.0
    %1178 = vmatpush1.msra.mxu0 0.0
    %1179 = vmatprep.subr.mxu0 0.0
    %1180 = vmatpush1.msra.mxu0 0.0
    %1181 = vmatprep.subr.mxu0 0.0
    %1182 = vmatpush1.msra.mxu0 0.0
    %1183 = vmatprep.subr.mxu0 0.0
    %1184 = vmatpush1.msra.mxu0 0.0
    %1185 = vmatprep.subr.mxu0 0.0
    %1186 = vmatpush1.msra.mxu0 0.0
    %1187 = vmatprep.subr.mxu0 0.0
    %1188 = vmatpush1.msra.mxu0 0.0
    %1189 = vmatprep.subr.mxu0 0.0
    %1190 = vmatpush1.msra.mxu0 0.0
    %1191 = vmatprep.subr.mxu0 0.0
    %1192 = vmatpush1.msra.mxu0 0.0
    %1193 = vmatprep.subr.mxu0 0.0
    %1194 = vmatpush1.msra.mxu0 0.0
    %1195 = vmatprep.subr.mxu0 0.0
    %1196 = vmatpush1.msra.mxu0 0.0
    %1197 = vmatprep.subr.mxu0 0.0
    %1198 = vmatpush1.msra.mxu0 0.0
    %1199 = vmatprep.subr.mxu0 0.0
    %1200 = vmatpush1.msra.mxu0 0.0
    %1201 = vmatprep.subr.mxu0 0.0
    %1202 = vmatpush1.msra.mxu0 0.0
    %1203 = vmatprep.subr.mxu0 0.0
    %1204 = vmatpush1.msra.mxu0 0.0
    %1205 = vmatprep.subr.mxu0 0.0
    %1206 = vmatpush1.msra.mxu0 0.0
    %1207 = vmatprep.subr.mxu0 0.0
    %1208 = vmatpush1.msra.mxu0 0.0
    %1209 = vmatprep.subr.mxu0 0.0
    %1210 = vmatpush1.msra.mxu0 0.0
    %1211 = vmatprep.subr.mxu0 0.0
    %1212 = vmatpush1.msra.mxu0 0.0
    %1213 = vmatprep.subr.mxu0 0.0
    %1214 = vmatpush1.msra.mxu0 0.0
    %1215 = vmatprep.mubr.f32.mxu0 0.0
    %1216 = vmatmul.mubr.f32.gmra.mrb[0].mxu0 %v1146
    %v1217 = vpop.f32.mrb[0].mxu0
    %v1218 = vadd.f32 %v1143, %v1217
    %v1219 = vpop.f32.mrb[0].mxu0
    %1220 = vmatprep.mubr.f32.mxu0 0.0
    %1221 = vmatmul.mubr.f32.gmra.mrb[0].mxu0 %v1149
    %v1222 = vpop.f32.mrb[0].mxu0
    %v1223 = vadd.f32 %v1143, %v1222
    %v1224 = vpop.f32.mrb[0].mxu0
    %1225 = vdwg.mxu0
    %vm1226 = vcmp.ge.f32.partialorder %v1218, 0.0
    %vm1227 = vcmp.ge.f32.partialorder %v1223, 0.0
    %v1228 = vld [vmem:[%s16] sm:$0x1]
    %v1230 = vlaneseq
    %v1231 = vshrl.u32 %v1230, 7
    %v1232 = vsub.s32 0, %v1231
    %v1233 = vrot.slane %v1228, %v1232
    %v1235 = vmul.f32 %v1233, %v1218
    %v1236 = vmul.f32 %v1233, %v1223
    %v1237 = vsel %vm1226, %v1218, %v1235
    %v1238 = vsel %vm1227, %v1223, %v1236
    %v1239 = vld [vmem:[%s17] sm:$0xff]
    %v1240 = vld [vmem:[%s17 + $0x8] sm:$0xff]
    %v1241 = vld [vmem:[#allocation2] sm:$0x1]
    %v1243 = vlaneseq
    %v1244 = vshrl.u32 %v1243, 7
    %v1245 = vsub.s32 0, %v1244
    %v1246 = vrot.slane %v1241, %v1245
    %v1249 = vsel %vm126, %v1237, 0
    %v1252 = vsel %vm126, %v1238, 0
    %1254 = vmatprep.subr.mxu0 0.0
    %1255 = vmatpush1.msra.mxu0 %v1239
    %1256 = vmatprep.subr.mxu0 0.0
    %1257 = vmatpush1.msra.mxu0 %v1240
    %1258 = vmatprep.subr.mxu0 0.0
    %1259 = vmatpush1.msra.mxu0 0.0
    %1260 = vmatprep.subr.mxu0 0.0
    %1261 = vmatpush1.msra.mxu0 0.0
    %1262 = vmatprep.subr.mxu0 0.0
    %1263 = vmatpush1.msra.mxu0 0.0
    %1264 = vmatprep.subr.mxu0 0.0
    %1265 = vmatpush1.msra.mxu0 0.0
    %1266 = vmatprep.subr.mxu0 0.0
    %1267 = vmatpush1.msra.mxu0 0.0
    %1268 = vmatprep.subr.mxu0 0.0
    %1269 = vmatpush1.msra.mxu0 0.0
    %1270 = vmatprep.subr.mxu0 0.0
    %1271 = vmatpush1.msra.mxu0 0.0
    %1272 = vmatprep.subr.mxu0 0.0
    %1273 = vmatpush1.msra.mxu0 0.0
    %1274 = vmatprep.subr.mxu0 0.0
    %1275 = vmatpush1.msra.mxu0 0.0
    %1276 = vmatprep.subr.mxu0 0.0
    %1277 = vmatpush1.msra.mxu0 0.0
    %1278 = vmatprep.subr.mxu0 0.0
    %1279 = vmatpush1.msra.mxu0 0.0
    %1280 = vmatprep.subr.mxu0 0.0
    %1281 = vmatpush1.msra.mxu0 0.0
    %1282 = vmatprep.subr.mxu0 0.0
    %1283 = vmatpush1.msra.mxu0 0.0
    %1284 = vmatprep.subr.mxu0 0.0
    %1285 = vmatpush1.msra.mxu0 0.0
    %1286 = vmatprep.subr.mxu0 0.0
    %1287 = vmatpush1.msra.mxu0 0.0
    %1288 = vmatprep.subr.mxu0 0.0
    %1289 = vmatpush1.msra.mxu0 0.0
    %1290 = vmatprep.subr.mxu0 0.0
    %1291 = vmatpush1.msra.mxu0 0.0
    %1292 = vmatprep.subr.mxu0 0.0
    %1293 = vmatpush1.msra.mxu0 0.0
    %1294 = vmatprep.subr.mxu0 0.0
    %1295 = vmatpush1.msra.mxu0 0.0
    %1296 = vmatprep.subr.mxu0 0.0
    %1297 = vmatpush1.msra.mxu0 0.0
    %1298 = vmatprep.subr.mxu0 0.0
    %1299 = vmatpush1.msra.mxu0 0.0
    %1300 = vmatprep.subr.mxu0 0.0
    %1301 = vmatpush1.msra.mxu0 0.0
    %1302 = vmatprep.subr.mxu0 0.0
    %1303 = vmatpush1.msra.mxu0 0.0
    %1304 = vmatprep.subr.mxu0 0.0
    %1305 = vmatpush1.msra.mxu0 0.0
    %1306 = vmatprep.subr.mxu0 0.0
    %1307 = vmatpush1.msra.mxu0 0.0
    %1308 = vmatprep.subr.mxu0 0.0
    %1309 = vmatpush1.msra.mxu0 0.0
    %1310 = vmatprep.subr.mxu0 0.0
    %1311 = vmatpush1.msra.mxu0 0.0
    %1312 = vmatprep.subr.mxu0 0.0
    %1313 = vmatpush1.msra.mxu0 0.0
    %1314 = vmatprep.subr.mxu0 0.0
    %1315 = vmatpush1.msra.mxu0 0.0
    %1316 = vmatprep.subr.mxu0 0.0
    %1317 = vmatpush1.msra.mxu0 0.0
    %1318 = vmatprep.mubr.f32.mxu0 0.0
    %1319 = vmatmul.mubr.f32.gmra.mrb[0].mxu0 %v1249
    %v1320 = vpop.f32.mrb[0].mxu0
    %v1321 = vadd.f32 %v1246, %v1320
    %v1322 = vpop.f32.mrb[0].mxu0
    %1323 = vmatprep.mubr.f32.mxu0 0.0
    %1324 = vmatmul.mubr.f32.gmra.mrb[0].mxu0 %v1252
    %v1325 = vpop.f32.mrb[0].mxu0
    %v1326 = vadd.f32 %v1246, %v1325
    %v1327 = vpop.f32.mrb[0].mxu0
    %1328 = vdwg.mxu0
    %v1329 = vxor.u32 %v1321, 2147483648
    %v1330 = vxor.u32 %v1326, 2147483648
    %v1331 = vmul.f32 %v1329, 1.442695
    %v1332 = vpow.pop %v1331
    %v1333 = vmul.f32 %v1330, 1.442695
    %v1334 = vpow.pop %v1333
    %v1335 = vadd.f32 %v1332, 1.0
    %v1336 = vadd.f32 %v1334, 1.0
    %v1337 = vrcp.pop %v1335
    %v1338 = vmul.f32 1.0, %v1337
    %v1339 = vrcp.pop %v1336
    %v1340 = vmul.f32 1.0, %v1339
    %vm1341 = vcmask 7168
    %1342 = vst.msk [vmem:[%s19] sm:$0xff] %vm1341, %v1338
    %1343 = vst.msk [vmem:[%s19 + $0x8] sm:$0xff] %vm1341, %v1340
    // Predicated region
    $region98: #{tpu_custom_call.1} parent=1 // pred_check
      _
    $region99: #{tpu_custom_call.1} parent=1 // pred_check_branch
      %1345 = sbr.rel (0) target = $region101
    $region100: #{tpu_custom_call.1} parent=1 // pred_region
      _
    $region101: #{tpu_custom_call.1} parent=1 // pred_fallthru
      _
    // Predicated region
    $region102: #{tpu_custom_call.1} parent=1 // pred_check
      _
    $region103: #{tpu_custom_call.1} parent=1 // pred_check_branch
      %1347 = sbr.rel (0) target = $region105
    $region104: #{tpu_custom_call.1} parent=1 // pred_region
      _
    $region105: #{tpu_custom_call.1} parent=1 // pred_fallthru
      _
    %1348 = vsyncpa [#allocation4], 1
    %1349 = vsyncpa [#allocation6], 1
    %1350 = vsyncpa [#allocation9], 1

</llo_original>
